<compile_context>
chip_gen: v6e
topology: v6e:2x2x1
jax: 0.10.0
libtpu: 0.0.40
codegen_flags: <defaults>
</compile_context>

<pallas_src>
import jax
import jax.numpy as jnp
from jax import lax
from jax.experimental import pallas as pl
from jax.experimental.pallas import tpu as pltpu

_ROW_TILE_VMEM_BUDGET = 16 * 1024 * 1024   # budget for the ~6 live row-tile buffers
_VMEM_LIMIT_BYTES = 32 * 1024 * 1024       # scoped VMEM limit; safe on v5e/v6e/v7x
_HP = lax.Precision.HIGHEST                # explicit f32 matmul precision in-kernel


# ----------------------------------------------------------------------------- helpers
def _round_up(x, m):
    return ((x + m - 1) // m) * m


def _prep_rows(x, row_gid, num_graphs):
    """Only pad tiny (< 128 row) inputs up to 128 rows (negligible, single tile).
    Large inputs are left untouched; the tail tile is masked inside the kernels."""
    n = x.shape[0]
    n_pad = max(n, 128)
    gid = row_gid.astype(jnp.int32)
    if n_pad != n:
        x = jnp.pad(x, ((0, n_pad - n), (0, 0)))
        gid = jnp.pad(gid, (0, n_pad - n), constant_values=num_graphs)  # sentinel id
    return x, gid.reshape(1, n_pad), n, n_pad


def _pick_row_tile(n_rows, hdim, tile_n, itemsize):
    """Largest multiple-of-128 row tile that fits the VMEM budget and never exceeds n_rows
    (n_rows >= 128 is guaranteed by _prep_rows, so blocks never exceed the array)."""
    cap = (_ROW_TILE_VMEM_BUDGET // (6 * hdim * itemsize)) // 128 * 128
    tn = max(128, min(_round_up(tile_n, 128), max(cap, 128)))
    tn = min(tn, (n_rows // 128) * 128)
    return max(tn, 128)


def _mlp_gate(c, w1_ref, b1_ref, w2_ref, b2_ref, w3_ref, b3_ref):
    """3-layer gating MLP (Linear/ReLU, Linear/ReLU, Linear/Sigmoid) on the tiny (G, H) ctx."""
    z = jnp.dot(c, w1_ref[...], precision=_HP, preferred_element_type=jnp.float32) + b1_ref[...]
    z = jnp.maximum(z, 0.0)
    z = jnp.dot(z, w2_ref[...], precision=_HP, preferred_element_type=jnp.float32) + b2_ref[...]
    z = jnp.maximum(z, 0.0)
    z = jnp.dot(z, w3_ref[...], precision=_HP, preferred_element_type=jnp.float32) + b3_ref[...]
    return jax.nn.sigmoid(z)


# ------------------------------------------- K1: segment mean + per-graph gate MLP (fused)
def _make_stats_gate_kernel(n, tn, num_graphs):
    def kernel(gid_ref, h_ref, w1_ref, b1_ref, w2_ref, b2_ref, w3_ref, b3_ref,
               gate_ref, acc_ref, cnt_ref):
        i = pl.program_id(0)

        @pl.when(i == 0)
        def _init():
            acc_ref[...] = jnp.zeros_like(acc_ref)
            cnt_ref[...] = jnp.zeros_like(cnt_ref)

        base = i * tn
        lane_valid = (base + lax.broadcasted_iota(jnp.int32, (1, tn), 1)) < n
        row_valid = (base + lax.broadcasted_iota(jnp.int32, (tn, 1), 0)) < n

        gid = jnp.where(lane_valid, gid_ref[...], num_graphs)               # (1, tn)
        onehot = (gid == lax.broadcasted_iota(jnp.int32, (num_graphs, tn), 0)
                  ).astype(jnp.float32)                                      # (G, tn) lane-major
        h = jnp.where(row_valid, h_ref[...], 0).astype(jnp.float32)         # tail rows -> 0

        # Per-graph feature sums on the MXU: (G, tn) @ (tn, H) -> (G, H).
        acc_ref[...] += jnp.dot(onehot, h, precision=_HP,
                                preferred_element_type=jnp.float32)
        cnt_ref[...] += jnp.sum(onehot, axis=1, keepdims=True)              # (G, 1)

        @pl.when(i == pl.num_programs(0) - 1)
        def _finalize():
            c = acc_ref[...] / jnp.maximum(cnt_ref[...], 1.0)
            gate_ref[...] = _mlp_gate(c, w1_ref, b1_ref, w2_ref, b2_ref, w3_ref, b3_ref)

    return kernel


def segment_mean_gate(h, row_gid, num_graphs, mlp_params, *, tile_n=1024):
    """sigmoid(MLP(scatter_mean(h, row_gid))) -> f32 [num_graphs, H] per-graph gate table."""
    w1, b1, w2, b2, w3, b3 = mlp_params
    hdim = h.shape[1]
    h_p, gid2d, n, n_pad = _prep_rows(h, row_gid, num_graphs)
    tn = _pick_row_tile(n_pad, hdim, tile_n, jnp.dtype(h.dtype).itemsize)
    inv = lambda i: (0, 0)

    return pl.pallas_call(
        _make_stats_gate_kernel(n, tn, num_graphs),
        out_shape=jax.ShapeDtypeStruct((num_graphs, hdim), jnp.float32),
        grid_spec=pltpu.PrefetchScalarGridSpec(
            num_scalar_prefetch=0,
            grid=(pl.cdiv(n_pad, tn),),
            in_specs=[
                pl.BlockSpec((1, tn), lambda i: (0, i)),            # row -> graph id (lane-major)
                pl.BlockSpec((tn, hdim), lambda i: (i, 0)),         # node features
                pl.BlockSpec((hdim, hdim), inv), pl.BlockSpec((1, hdim), inv),   # W1, b1
                pl.BlockSpec((hdim, hdim), inv), pl.BlockSpec((1, hdim), inv),   # W2, b2
                pl.BlockSpec((hdim, hdim), inv), pl.BlockSpec((1, hdim), inv),   # W3, b3
            ],
            out_specs=pl.BlockSpec((num_graphs, hdim), inv),        # resident gate table
            scratch_shapes=[pltpu.VMEM((num_graphs, hdim), jnp.float32),   # per-graph sums
                            pltpu.VMEM((num_graphs, 1), jnp.float32)],     # per-graph counts
        ),
        compiler_params=pltpu.CompilerParams(
            dimension_semantics=("arbitrary",), vmem_limit_bytes=_VMEM_LIMIT_BYTES),
    )(gid2d, h_p, w1, b1, w2, b2, w3, b3)


# --------------------- K2: apply gate + (fused) segment mean of gated rows + next gate MLP
def _make_gate_stats_kernel(n, tn, num_graphs):
    def kernel(gid_ref, x_ref, gin_ref, w1_ref, b1_ref, w2_ref, b2_ref, w3_ref, b3_ref,
               o_ref, gout_ref, acc_ref, cnt_ref):
        i = pl.program_id(0)

        @pl.when(i == 0)
        def _init():
            acc_ref[...] = jnp.zeros_like(acc_ref)
            cnt_ref[...] = jnp.zeros_like(cnt_ref)

        base = i * tn
        lane_valid = (base + lax.broadcasted_iota(jnp.int32, (1, tn), 1)) < n
        row_valid = (base + lax.broadcasted_iota(jnp.int32, (tn, 1), 0)) < n

        gid = jnp.where(lane_valid, gid_ref[...], num_graphs)               # (1, tn)
        onehot = (gid == lax.broadcasted_iota(jnp.int32, (num_graphs, tn), 0)
                  ).astype(jnp.float32)                                      # (G, tn)

        # Gather per-row gate: contract the graph axis of (G, tn) and (G, H) -> (tn, H).
        gate_rows = lax.dot_general(onehot, gin_ref[...], (((0,), (0,)), ((), ())),
                                    precision=_HP, preferred_element_type=jnp.float32)

        x = jnp.where(row_valid, x_ref[...], 0).astype(jnp.float32)         # tail rows -> 0
        gated = x * gate_rows                                                # tail rows exactly 0
        o_ref[...] = gated.astype(o_ref.dtype)

        # Fused edge-context scatter_mean over the freshly gated rows (no h_V re-read).
        acc_ref[...] += jnp.dot(onehot, gated, precision=_HP,
                                preferred_element_type=jnp.float32)
        cnt_ref[...] += jnp.sum(onehot, axis=1, keepdims=True)

        @pl.when(i == pl.num_programs(0) - 1)
        def _finalize():
            c = acc_ref[...] / jnp.maximum(cnt_ref[...], 1.0)
            gout_ref[...] = _mlp_gate(c, w1_ref, b1_ref, w2_ref, b2_ref, w3_ref, b3_ref)

    return kernel


def gate_and_next_gate(x, row_gid, gate_in, num_graphs, mlp_params, *, tile_n=1024):
    """Returns (x * gate_in[row_gid], sigmoid(MLP(scatter_mean(x*gate, row_gid)))) in one pass."""
    w1, b1, w2, b2, w3, b3 = mlp_params
    hdim = x.shape[1]
    x_p, gid2d, n, n_pad = _prep_rows(x, row_gid, num_graphs)
    tn = _pick_row_tile(n_pad, hdim, tile_n, jnp.dtype(x.dtype).itemsize)
    inv = lambda i: (0, 0)

    gated, gate_out = pl.pallas_call(
        _make_gate_stats_kernel(n, tn, num_graphs),
        out_shape=(jax.ShapeDtypeStruct((n_pad, hdim), x.dtype),
                   jax.ShapeDtypeStruct((num_graphs, hdim), jnp.float32)),
        grid_spec=pltpu.PrefetchScalarGridSpec(
            num_scalar_prefetch=0,
            grid=(pl.cdiv(n_pad, tn),),
            in_specs=[
                pl.BlockSpec((1, tn), lambda i: (0, i)),            # row -> graph id
                pl.BlockSpec((tn, hdim), lambda i: (i, 0)),         # rows to gate
                pl.BlockSpec((num_graphs, hdim), inv),              # per-graph gate (node path)
                pl.BlockSpec((hdim, hdim), inv), pl.BlockSpec((1, hdim), inv),   # W1, b1 (edge MLP)
                pl.BlockSpec((hdim, hdim), inv), pl.BlockSpec((1, hdim), inv),   # W2, b2
                pl.BlockSpec((hdim, hdim), inv), pl.BlockSpec((1, hdim), inv),   # W3, b3
            ],
            out_specs=[pl.BlockSpec((tn, hdim), lambda i: (i, 0)),  # gated rows (lane-dense)
                       pl.BlockSpec((num_graphs, hdim), inv)],      # next per-graph gate table
            scratch_shapes=[pltpu.VMEM((num_graphs, hdim), jnp.float32),
                            pltpu.VMEM((num_graphs, 1), jnp.float32)],
        ),
        compiler_params=pltpu.CompilerParams(
            dimension_semantics=("arbitrary",), vmem_limit_bytes=_VMEM_LIMIT_BYTES),
    )(gid2d, x_p, gate_in, w1, b1, w2, b2, w3, b3)
    if n_pad != n:
        gated = gated[:n]
    return gated, gate_out


# -------------------------------------------------------- K3: gather + elementwise gate only
def _make_apply_gate_kernel(num_graphs):
    def kernel(gid_ref, x_ref, gate_ref, o_ref):
        tn = gid_ref.shape[1]
        onehot = (gid_ref[...] == lax.broadcasted_iota(jnp.int32, (num_graphs, tn), 0)
                  ).astype(jnp.float32)                                      # (G, tn)
        gate_rows = lax.dot_general(onehot, gate_ref[...], (((0,), (0,)), ((), ())),
                                    precision=_HP, preferred_element_type=jnp.float32)
        # No tail masking needed: out-of-bounds rows are dropped on writeback.
        o_ref[...] = (x_ref[...].astype(jnp.float32) * gate_rows).astype(o_ref.dtype)

    return kernel


def apply_gate(x, row_gid, gate, num_graphs, *, tile_n=1024):
    """x * gate[row_gid] with the per-graph gate table resident in VMEM."""
    hdim = x.shape[1]
    x_p, gid2d, n, n_pad = _prep_rows(x, row_gid, num_graphs)
    tn = _pick_row_tile(n_pad, hdim, tile_n, jnp.dtype(x.dtype).itemsize)
    inv = lambda i: (0, 0)

    out = pl.pallas_call(
        _make_apply_gate_kernel(num_graphs),
        out_shape=jax.ShapeDtypeStruct((n_pad, hdim), x.dtype),
        grid_spec=pltpu.PrefetchScalarGridSpec(
            num_scalar_prefetch=0,
            grid=(pl.cdiv(n_pad, tn),),
            in_specs=[pl.BlockSpec((1, tn), lambda i: (0, i)),
                      pl.BlockSpec((tn, hdim), lambda i: (i, 0)),
                      pl.BlockSpec((num_graphs, hdim), inv)],
            out_specs=pl.BlockSpec((tn, hdim), lambda i: (i, 0)),
        ),
        compiler_params=pltpu.CompilerParams(
            dimension_semantics=("parallel",), vmem_limit_bytes=_VMEM_LIMIT_BYTES),
    )(gid2d, x_p, gate)
    return out[:n] if n_pad != n else out


# --------------------------------------------------------------------------- module forward
def context_forward(h_V, h_E, edge_idx, batch_id, params, num_graphs,
                    *, node_context=True, edge_context=True, tile_n=1024):
    """Pallas port of Context.forward.  (PyTorch defaults node_context=edge_context=False make
    forward the identity; enable the flags to exercise the gating paths.)"""
    if node_context and edge_context:
        gate_V = segment_mean_gate(h_V, batch_id, num_graphs, params["V_MLP_g"], tile_n=tile_n)
        # Fused: gate h_V and compute the edge-path per-graph gate in the same HBM pass.
        h_V, gate_E = gate_and_next_gate(h_V, batch_id, gate_V, num_graphs,
                                         params["E_MLP_g"], tile_n=tile_n)
        edge_gid = batch_id[edge_idx[0]]   # tiny per-edge int gather: plain-JAX glue
        h_E = apply_gate(h_E, edge_gid, gate_E, num_graphs, tile_n=tile_n)
    elif node_context:
        gate_V = segment_mean_gate(h_V, batch_id, num_graphs, params["V_MLP_g"], tile_n=tile_n)
        h_V = apply_gate(h_V, batch_id, gate_V, num_graphs, tile_n=tile_n)
    elif edge_context:
        gate_E = segment_mean_gate(h_V, batch_id, num_graphs, params["E_MLP_g"], tile_n=tile_n)
        edge_gid = batch_id[edge_idx[0]]
        h_E = apply_gate(h_E, edge_gid, gate_E, num_graphs, tile_n=tile_n)
    return h_V, h_E


# ------------------------------------------------------------------------------------ demo
if __name__ == "__main__":
    H = 32            # num_hidden
    NUM_GRAPHS = 3    # graphs packed in the batch
    N = 140           # nodes (forces a 2-step grid + masked tail at tile_n=128)
    E = 60            # edges (< 128 -> exercises the tiny-input pad path)

    key = jax.random.PRNGKey(0)
    keys = jax.random.split(key, 16)
    bound = 1.0 / (H ** 0.5)

    def init_mlp(ks):
        def lin(kw, kb):
            w = jax.random.uniform(kw, (H, H), jnp.float32, -bound, bound)   # [in, out]
            b = jax.random.uniform(kb, (1, H), jnp.float32, -bound, bound)
            return w, b
        w1, b1 = lin(ks[0], ks[1])
        w2, b2 = lin(ks[2], ks[3])
        w3, b3 = lin(ks[4], ks[5])
        return (w1, b1, w2, b2, w3, b3)

    params = {"V_MLP_g": init_mlp(keys[0:6]), "E_MLP_g": init_mlp(keys[6:12])}
    # TODO(synk): V_MLP / E_MLP (non-gating branches) are unused by Context.forward, so not ported.

    h_V = jax.random.normal(keys[12], (N, H), jnp.float32)
    h_E = jax.random.normal(keys[13], (E, H), jnp.float32)
    batch_id = jnp.concatenate([jnp.zeros((50,), jnp.int32),
                                jnp.ones((60,), jnp.int32),
                                jnp.full((30,), 2, jnp.int32)])
    edge_src = jax.random.randint(keys[14], (E,), 0, N, dtype=jnp.int32)
    edge_dst = jax.random.randint(keys[15], (E,), 0, N, dtype=jnp.int32)
    edge_idx = jnp.stack([edge_src, edge_dst], axis=0)

    # tile_n=128 at demo scale to exercise multi-step accumulation; production default is 1024.
    hV_out, hE_out = context_forward(h_V, h_E, edge_idx, batch_id, params, NUM_GRAPHS,
                                     node_context=True, edge_context=True, tile_n=128)
    jax.block_until_ready((hV_out, hE_out))

    # ---------------------------- pure-JAX reference ----------------------------
    def mlp_g_ref(x, p):
        w1, b1, w2, b2, w3, b3 = p
        x = jax.nn.relu(x @ w1 + b1)
        x = jax.nn.relu(x @ w2 + b2)
        return jax.nn.sigmoid(x @ w3 + b3)

    def scatter_mean_ref(h, gid, nseg):
        onehot = (gid[:, None] == jnp.arange(nseg)[None, :]).astype(h.dtype)
        s = onehot.T @ h
        cnt = jnp.sum(onehot, axis=0)[:, None]
        return s / jnp.maximum(cnt, 1.0)

    # Scope full-precision matmuls to the reference only (the kernels request HIGHEST explicitly).
    with jax.default_matmul_precision("highest"):
        hV_ref = h_V
        cV = scatter_mean_ref(hV_ref, batch_id, NUM_GRAPHS)
        hV_ref = hV_ref * mlp_g_ref(cV[batch_id], params["V_MLP_g"])
        cV = scatter_mean_ref(hV_ref, batch_id, NUM_GRAPHS)
        hE_ref = h_E * mlp_g_ref(cV[batch_id[edge_idx[0]]], params["E_MLP_g"])
        hV_ref, hE_ref = jax.block_until_ready((hV_ref, hE_ref))

    assert hV_out.shape == (N, H) and hE_out.shape == (E, H)
    assert jnp.allclose(hV_out, hV_ref, atol=1e-4, rtol=1e-4), "h_V mismatch"
    assert jnp.allclose(hE_out, hE_ref, atol=1e-4, rtol=1e-4), "h_E mismatch"

    print("KERNEL_OK")
</pallas_src>

<mosaic_0001>
module attributes {stable_mosaic.version = 11 : i64} {
  func.func @kernel(%arg0: i32, %arg1: memref<1x128xi32, #tpu.memory_space<vmem>>, %arg2: memref<128x32xf32, #tpu.memory_space<vmem>>, %arg3: memref<32x32xf32, #tpu.memory_space<vmem>>, %arg4: memref<1x32xf32, #tpu.memory_space<vmem>>, %arg5: memref<32x32xf32, #tpu.memory_space<vmem>>, %arg6: memref<1x32xf32, #tpu.memory_space<vmem>>, %arg7: memref<32x32xf32, #tpu.memory_space<vmem>>, %arg8: memref<1x32xf32, #tpu.memory_space<vmem>>, %arg9: memref<3x32xf32, #tpu.memory_space<vmem>>, %arg10: memref<3x32xf32, #tpu.memory_space<vmem>>, %arg11: memref<3x1xf32, #tpu.memory_space<vmem>>) attributes {dimension_semantics = [#tpu.dimension_semantics<arbitrary>], iteration_bounds = array<i64: 2>, scalar_prefetch = 0 : i64, scratch_operands = 2 : i64, tpu.core_type = #tpu.core_type<tc>, window_params = [{transform_indices = @transform_0, window_bounds = array<i64: 1, 128>}, {transform_indices = @transform_1, window_bounds = array<i64: 128, 32>}, {pipeline_mode = #tpu.pipeline_mode<synchronous>, transform_indices = @transform_2, window_bounds = array<i64: 32, 32>}, {pipeline_mode = #tpu.pipeline_mode<synchronous>, transform_indices = @transform_3, window_bounds = array<i64: 1, 32>}, {pipeline_mode = #tpu.pipeline_mode<synchronous>, transform_indices = @transform_4, window_bounds = array<i64: 32, 32>}, {pipeline_mode = #tpu.pipeline_mode<synchronous>, transform_indices = @transform_5, window_bounds = array<i64: 1, 32>}, {pipeline_mode = #tpu.pipeline_mode<synchronous>, transform_indices = @transform_6, window_bounds = array<i64: 32, 32>}, {pipeline_mode = #tpu.pipeline_mode<synchronous>, transform_indices = @transform_7, window_bounds = array<i64: 1, 32>}, {pipeline_mode = #tpu.pipeline_mode<synchronous>, transform_indices = @transform_8, window_bounds = array<i64: 3, 32>}]} {
    %c0_i32 = arith.constant 0 : i32
    %0 = arith.cmpi eq, %arg0, %c0_i32 : i32
    %1 = arith.extui %0 : i1 to i32
    %c0_i32_0 = arith.constant 0 : i32
    %2 = arith.cmpi ne, %1, %c0_i32_0 : i32
    scf.if %2 {
      %cst_16 = arith.constant 0.000000e+00 : f32
      %40 = vector.broadcast %cst_16 : f32 to vector<3x32xf32>
      %c0_17 = arith.constant 0 : index
      %c0_18 = arith.constant 0 : index
      %41 = vector.load %arg10[%c0_17, %c0_18] : memref<3x32xf32, #tpu.memory_space<vmem>>, vector<3x32xf32>
      tpu.vector_store %arg10[%c0_17, %c0_18], %40 {strides = array<i32>} : memref<3x32xf32, #tpu.memory_space<vmem>>, vector<3x32xf32>,
      %cst_19 = arith.constant 0.000000e+00 : f32
      %42 = vector.broadcast %cst_19 : f32 to vector<3x1xf32>
      %c0_20 = arith.constant 0 : index
      %c0_21 = arith.constant 0 : index
      %43 = vector.load %arg11[%c0_20, %c0_21] : memref<3x1xf32, #tpu.memory_space<vmem>>, vector<3x1xf32>
      tpu.vector_store %arg11[%c0_20, %c0_21], %42 {strides = array<i32>} : memref<3x1xf32, #tpu.memory_space<vmem>>, vector<3x1xf32>,
    } else {
    }
    %c128_i32 = arith.constant 128 : i32
    %3 = arith.muli %arg0, %c128_i32 : i32
    %4 = tpu.iota {dimensions = array<i32: 1>} : vector<1x128xi32>
    %5 = vector.broadcast %3 : i32 to vector<1x128xi32>
    %6 = arith.addi %5, %4 : vector<1x128xi32>
    %c140_i32 = arith.constant 140 : i32
    %7 = vector.broadcast %c140_i32 : i32 to vector<1x128xi32>
    %8 = arith.cmpi slt, %6, %7 : vector<1x128xi32>
    %9 = tpu.iota {dimensions = array<i32: 0>} : vector<128x1xi32>
    %10 = vector.broadcast %3 : i32 to vector<128x1xi32>
    %11 = arith.addi %10, %9 : vector<128x1xi32>
    %c140_i32_1 = arith.constant 140 : i32
    %12 = vector.broadcast %c140_i32_1 : i32 to vector<128x1xi32>
    %13 = arith.cmpi slt, %11, %12 : vector<128x1xi32>
    %c0 = arith.constant 0 : index
    %c0_2 = arith.constant 0 : index
    %14 = vector.load %arg1[%c0, %c0_2] : memref<1x128xi32, #tpu.memory_space<vmem>>, vector<1x128xi32>
    %c3_i32 = arith.constant 3 : i32
    %15 = vector.broadcast %c3_i32 : i32 to vector<1x128xi32>
    %16 = arith.select %8, %14, %15 : vector<1x128xi1>, vector<1x128xi32>
    %17 = tpu.iota {dimensions = array<i32: 0>} : vector<3x128xi32>
    %18 = vector.broadcast %16 : vector<1x128xi32> to vector<3x128xi32>
    %19 = arith.cmpi eq, %18, %17 : vector<3x128xi32>
    %20 = arith.extui %19 : vector<3x128xi1> to vector<3x128xi32>
    %21 = arith.sitofp %20 : vector<3x128xi32> to vector<3x128xf32>
    %c0_3 = arith.constant 0 : index
    %c0_4 = arith.constant 0 : index
    %22 = vector.load %arg2[%c0_3, %c0_4] : memref<128x32xf32, #tpu.memory_space<vmem>>, vector<128x32xf32>
    %c0_i32_5 = arith.constant 0 : i32
    %23 = arith.sitofp %c0_i32_5 : i32 to f32
    %24 = vector.shape_cast %13 : vector<128x1xi1> to vector<128x1xi1>
    %25 = vector.broadcast %24 : vector<128x1xi1> to vector<128x32xi1>
    %26 = vector.broadcast %23 : f32 to vector<128x32xf32>
    %27 = arith.select %25, %22, %26 : vector<128x32xi1>, vector<128x32xf32>
    %c0_6 = arith.constant 0 : index
    %c0_7 = arith.constant 0 : index
    %28 = vector.load %arg10[%c0_6, %c0_7] : memref<3x32xf32, #tpu.memory_space<vmem>>, vector<3x32xf32>
    %cst = arith.constant dense<0.000000e+00> : vector<3x32xf32>
    %29 = tpu.matmul %21, %27, %cst {dimension_numbers = #tpu.dot_dimension_numbers<[1], [0], [0], [1], [0, 0, 1, 1], [], []>, precision = #tpu.contract_precision<fp32>} : vector<3x128xf32>, vector<128x32xf32>, vector<3x32xf32> -> vector<3x32xf32>
    %30 = arith.addf %28, %29 : vector<3x32xf32>
    %c0_8 = arith.constant 0 : index
    %c0_9 = arith.constant 0 : index
    %31 = vector.load %arg10[%c0_8, %c0_9] : memref<3x32xf32, #tpu.memory_space<vmem>>, vector<3x32xf32>
    tpu.vector_store %arg10[%c0_8, %c0_9], %30 {strides = array<i32>} : memref<3x32xf32, #tpu.memory_space<vmem>>, vector<3x32xf32>,
    %c0_10 = arith.constant 0 : index
    %c0_11 = arith.constant 0 : index
    %32 = vector.load %arg11[%c0_10, %c0_11] : memref<3x1xf32, #tpu.memory_space<vmem>>, vector<3x1xf32>
    %cst_12 = arith.constant dense<0.000000e+00> : vector<3xf32>
    %33 = vector.multi_reduction <add>, %21, %cst_12 [1] : vector<3x128xf32> to vector<3xf32>
    %34 = vector.shape_cast %33 : vector<3xf32> to vector<3x1xf32>
    %35 = arith.addf %32, %34 : vector<3x1xf32>
    %c0_13 = arith.constant 0 : index
    %c0_14 = arith.constant 0 : index
    %36 = vector.load %arg11[%c0_13, %c0_14] : memref<3x1xf32, #tpu.memory_space<vmem>>, vector<3x1xf32>
    tpu.vector_store %arg11[%c0_13, %c0_14], %35 {strides = array<i32>} : memref<3x1xf32, #tpu.memory_space<vmem>>, vector<3x1xf32>,
    %c1_i32 = arith.constant 1 : i32
    %37 = arith.cmpi eq, %arg0, %c1_i32 : i32
    %38 = arith.extui %37 : i1 to i32
    %c0_i32_15 = arith.constant 0 : i32
    %39 = arith.cmpi ne, %38, %c0_i32_15 : i32
    scf.if %39 {
      %c0_16 = arith.constant 0 : index
      %c0_17 = arith.constant 0 : index
      %40 = vector.load %arg10[%c0_16, %c0_17] : memref<3x32xf32, #tpu.memory_space<vmem>>, vector<3x32xf32>
      %c0_18 = arith.constant 0 : index
      %c0_19 = arith.constant 0 : index
      %41 = vector.load %arg11[%c0_18, %c0_19] : memref<3x1xf32, #tpu.memory_space<vmem>>, vector<3x1xf32>
      %cst_20 = arith.constant 1.000000e+00 : f32
      %42 = vector.broadcast %cst_20 : f32 to vector<3x1xf32>
      %43 = arith.maximumf %41, %42 : vector<3x1xf32>
      %44 = vector.broadcast %43 : vector<3x1xf32> to vector<3x32xf32>
      %45 = arith.divf %40, %44 : vector<3x32xf32>
      %c0_21 = arith.constant 0 : index
      %c0_22 = arith.constant 0 : index
      %46 = vector.load %arg3[%c0_21, %c0_22] : memref<32x32xf32, #tpu.memory_space<vmem>>, vector<32x32xf32>
      %cst_23 = arith.constant dense<0.000000e+00> : vector<3x32xf32>
      %47 = tpu.matmul %45, %46, %cst_23 {dimension_numbers = #tpu.dot_dimension_numbers<[1], [0], [0], [1], [0, 0, 1, 1], [], []>, precision = #tpu.contract_precision<fp32>} : vector<3x32xf32>, vector<32x32xf32>, vector<3x32xf32> -> vector<3x32xf32>
      %c0_24 = arith.constant 0 : index
      %c0_25 = arith.constant 0 : index
      %48 = vector.load %arg4[%c0_24, %c0_25] : memref<1x32xf32, #tpu.memory_space<vmem>>, vector<1x32xf32>
      %49 = vector.broadcast %48 : vector<1x32xf32> to vector<3x32xf32>
      %50 = arith.addf %47, %49 : vector<3x32xf32>
      %cst_26 = arith.constant 0.000000e+00 : f32
      %51 = vector.broadcast %cst_26 : f32 to vector<3x32xf32>
      %52 = arith.maximumf %50, %51 : vector<3x32xf32>
      %c0_27 = arith.constant 0 : index
      %c0_28 = arith.constant 0 : index
      %53 = vector.load %arg5[%c0_27, %c0_28] : memref<32x32xf32, #tpu.memory_space<vmem>>, vector<32x32xf32>
      %cst_29 = arith.constant dense<0.000000e+00> : vector<3x32xf32>
      %54 = tpu.matmul %52, %53, %cst_29 {dimension_numbers = #tpu.dot_dimension_numbers<[1], [0], [0], [1], [0, 0, 1, 1], [], []>, precision = #tpu.contract_precision<fp32>} : vector<3x32xf32>, vector<32x32xf32>, vector<3x32xf32> -> vector<3x32xf32>
      %c0_30 = arith.constant 0 : index
      %c0_31 = arith.constant 0 : index
      %55 = vector.load %arg6[%c0_30, %c0_31] : memref<1x32xf32, #tpu.memory_space<vmem>>, vector<1x32xf32>
      %56 = vector.broadcast %55 : vector<1x32xf32> to vector<3x32xf32>
      %57 = arith.addf %54, %56 : vector<3x32xf32>
      %cst_32 = arith.constant 0.000000e+00 : f32
      %58 = vector.broadcast %cst_32 : f32 to vector<3x32xf32>
      %59 = arith.maximumf %57, %58 : vector<3x32xf32>
      %c0_33 = arith.constant 0 : index
      %c0_34 = arith.constant 0 : index
      %60 = vector.load %arg7[%c0_33, %c0_34] : memref<32x32xf32, #tpu.memory_space<vmem>>, vector<32x32xf32>
      %cst_35 = arith.constant dense<0.000000e+00> : vector<3x32xf32>
      %61 = tpu.matmul %59, %60, %cst_35 {dimension_numbers = #tpu.dot_dimension_numbers<[1], [0], [0], [1], [0, 0, 1, 1], [], []>, precision = #tpu.contract_precision<fp32>} : vector<3x32xf32>, vector<32x32xf32>, vector<3x32xf32> -> vector<3x32xf32>
      %c0_36 = arith.constant 0 : index
      %c0_37 = arith.constant 0 : index
      %62 = vector.load %arg8[%c0_36, %c0_37] : memref<1x32xf32, #tpu.memory_space<vmem>>, vector<1x32xf32>
      %63 = vector.broadcast %62 : vector<1x32xf32> to vector<3x32xf32>
      %64 = arith.addf %61, %63 : vector<3x32xf32>
      %65 = arith.negf %64 : vector<3x32xf32>
      %66 = math.exp %65 : vector<3x32xf32>
      %cst_38 = arith.constant 1.000000e+00 : f32
      %67 = vector.broadcast %cst_38 : f32 to vector<3x32xf32>
      %68 = arith.addf %67, %66 : vector<3x32xf32>
      %69 = arith.divf %67, %68 : vector<3x32xf32>
      %c0_39 = arith.constant 0 : index
      %c0_40 = arith.constant 0 : index
      %70 = vector.load %arg9[%c0_39, %c0_40] : memref<3x32xf32, #tpu.memory_space<vmem>>, vector<3x32xf32>
      tpu.vector_store %arg9[%c0_39, %c0_40], %69 {strides = array<i32>} : memref<3x32xf32, #tpu.memory_space<vmem>>, vector<3x32xf32>,
    } else {
    }
    return
  }
  func.func @transform_0(%arg0: i32) -> (i32, i32) {
    %c0_i32 = arith.constant 0 : i32
    %c0_i32_0 = arith.constant 0 : i32
    return %c0_i32, %arg0 : i32, i32
  }
  func.func @transform_1(%arg0: i32) -> (i32, i32) {
    %c0_i32 = arith.constant 0 : i32
    %c0_i32_0 = arith.constant 0 : i32
    return %arg0, %c0_i32 : i32, i32
  }
  func.func @transform_2(%arg0: i32) -> (i32, i32) {
    %c0_i32 = arith.constant 0 : i32
    %c0_i32_0 = arith.constant 0 : i32
    %c0_i32_1 = arith.constant 0 : i32
    return %c0_i32, %c0_i32_0 : i32, i32
  }
  func.func @transform_3(%arg0: i32) -> (i32, i32) {
    %c0_i32 = arith.constant 0 : i32
    %c0_i32_0 = arith.constant 0 : i32
    %c0_i32_1 = arith.constant 0 : i32
    return %c0_i32, %c0_i32_0 : i32, i32
  }
  func.func @transform_4(%arg0: i32) -> (i32, i32) {
    %c0_i32 = arith.constant 0 : i32
    %c0_i32_0 = arith.constant 0 : i32
    %c0_i32_1 = arith.constant 0 : i32
    return %c0_i32, %c0_i32_0 : i32, i32
  }
  func.func @transform_5(%arg0: i32) -> (i32, i32) {
    %c0_i32 = arith.constant 0 : i32
    %c0_i32_0 = arith.constant 0 : i32
    %c0_i32_1 = arith.constant 0 : i32
    return %c0_i32, %c0_i32_0 : i32, i32
  }
  func.func @transform_6(%arg0: i32) -> (i32, i32) {
    %c0_i32 = arith.constant 0 : i32
    %c0_i32_0 = arith.constant 0 : i32
    %c0_i32_1 = arith.constant 0 : i32
    return %c0_i32, %c0_i32_0 : i32, i32
  }
  func.func @transform_7(%arg0: i32) -> (i32, i32) {
    %c0_i32 = arith.constant 0 : i32
    %c0_i32_0 = arith.constant 0 : i32
    %c0_i32_1 = arith.constant 0 : i32
    return %c0_i32, %c0_i32_0 : i32, i32
  }
  func.func @transform_8(%arg0: i32) -> (i32, i32) {
    %c0_i32 = arith.constant 0 : i32
    %c0_i32_0 = arith.constant 0 : i32
    %c0_i32_1 = arith.constant 0 : i32
    return %c0_i32, %c0_i32_0 : i32, i32
  }
}

</mosaic_0001>

<llo_original>
// kernel: tpu_custom_call.1
$region0: #{tpu_custom_call.1}
  #allocation0 [shape = 'u32[]', space=smem, size = 0x4, offset = 0x4, fixed_abs, tag = 'smem constant byte address 0x4 - core index']
  #allocation1 [shape = 'u32[144,128]{1,0:T(1,128)}', space=vmem, size = 0x12000, scoped, tag = 'internal scratch']
  #allocation2 [shape = 'f32[3,32]{1,0:T(4,128)}', space=vmem, size = 0x800, scoped, tag = 'scratch operand']
  #allocation3 [shape = 'f32[3,1]{1,0:T(4,128)}', space=vmem, size = 0x800, scoped, tag = 'scratch operand']
  %s0 = inlined_call_operand.vmem [shape: s32[1,140], index: 0, kind: input, shape index: {}]
  %s1 = inlined_call_operand.vmem [shape: f32[140,32], index: 1, kind: input, shape index: {}]
  %s2 = inlined_call_operand.vmem [shape: f32[32,32], index: 2, kind: input, shape index: {}]
  %s3 = inlined_call_operand.vmem [shape: f32[1,32], index: 3, kind: input, shape index: {}]
  %s4 = inlined_call_operand.vmem [shape: f32[32,32], index: 4, kind: input, shape index: {}]
  %s5 = inlined_call_operand.vmem [shape: f32[1,32], index: 5, kind: input, shape index: {}]
  %s6 = inlined_call_operand.vmem [shape: f32[32,32], index: 6, kind: input, shape index: {}]
  %s7 = inlined_call_operand.vmem [shape: f32[1,32], index: 7, kind: input, shape index: {}]
  %s8 = inlined_call_operand.hbm [shape: f32[3,32], index: 8, kind: output, shape index: {}]
  %s9 = sld [smem:[#allocation0]]
  $region73: #{tpu_custom_call.1} parent=0
    _
  %s11 = ssub.s32 1, %s9
  %s12 = scalar_select 0, %s11, %s9
  $region1: #{tpu_custom_call.1} parent=0
    #allocation4 [shape = 'u8[2048]{0}', space=vmem, size = 0x800, scoped, tag = 'output window, operand 0, single buffered']
    #allocation5 [shape = 's32[2]{0}', space=sflag, size = 0x8, scoped, tag = 'scoped memory for tpu_custom_call.1']
    %13 = vsyncpa [#allocation5], 0
    loop: start=0, step=1, limit=4
    $region2: #{tpu_custom_call.1} parent=1 // loop_pre_header
      _
    $region3: #{tpu_custom_call.1} parent=1 // loop_header
      %s15 = sphi 0, %s19
      %p16 = scmp.ge.s32.totalorder %s15, 4
      %s25 = sphi 0, %s27
      %s28 = sphi 0, %s25
      %s29 = sphi 0, %s28
      %s45 = sphi 0, %s29
      %s51 = sphi 0, %s53
      %s54 = sphi 0, %s51
      %s55 = sphi 0, %s54
      %s71 = sphi 0, %s55
      %s75 = sphi 0, %s75
      %s77 = sphi 0, %s75
      %s78 = sphi 0, %s77
      %s92 = sphi 0, %s78
      %s96 = sphi 0, %s96
      %s98 = sphi 0, %s96
      %s99 = sphi 0, %s98
      %s113 = sphi 0, %s99
      %s117 = sphi 0, %s117
      %s119 = sphi 0, %s117
      %s120 = sphi 0, %s119
      %s134 = sphi 0, %s120
      %s138 = sphi 0, %s138
      %s140 = sphi 0, %s138
      %s141 = sphi 0, %s140
      %s155 = sphi 0, %s141
      %s159 = sphi 0, %s159
      %s161 = sphi 0, %s159
      %s162 = sphi 0, %s161
      %s176 = sphi 0, %s162
      %s180 = sphi 0, %s180
      %s182 = sphi 0, %s180
      %s183 = sphi 0, %s182
      %s197 = sphi 0, %s183
      %s201 = sphi 0, %s201
      %s203 = sphi 0, %s201
      %s204 = sphi 0, %s203
      %s218 = sphi 0, %s204
    $region4: #{tpu_custom_call.1} parent=1 // loop_header_branch
      %18 = sbr.rel (%p16) target = $region8
    $region5: #{tpu_custom_call.1} parent=1 // loop_body
      %s20 = ssub.s32 %s15, 1
      %s21 = ssub.s32 %s15, 2
      %s22 = sadd.s32 %s15, 1
      %s23 = ssub.s32 %s15, %s22
      %p24 = scmp.eq.s32.totalorder %s23, 0
      %s26 = sadd.s32 %s25, 1
      %s27 = scalar_select %p24, %s25, %s26
      %p30 = pneg %p24
      %p31 = scmp.eq.s32.totalorder %s15, 1
      %p32 = por %p30, %p31
      %p33 = scmp.ne.s32.totalorder %s25, %s28
      %p34 = scmp.eq.s32.totalorder %s15, 0
      %p35 = por %p33, %p34
      %p36 = scmp.ne.s32.totalorder %s25, %s28
      %p37 = scmp.eq.s32.totalorder %s20, 1
      %p38 = por %p36, %p37
      %p39 = scmp.ne.s32.totalorder %s28, %s29
      %p40 = scmp.eq.s32.totalorder %s20, 0
      %p41 = por %p39, %p40
      %p42 = scmp.ne.s32.totalorder %s28, %s29
      %p43 = scmp.eq.s32.totalorder %s21, 1
      %p44 = por %p42, %p43
      %p46 = scmp.ne.s32.totalorder %s29, %s45
      %p47 = scmp.eq.s32.totalorder %s21, 0
      %p48 = por %p46, %p47
      %s49 = ssub.s32 %s15, %s22
      %p50 = scmp.eq.s32.totalorder %s49, 0
      %s52 = sadd.s32 %s51, 1
      %s53 = scalar_select %p50, %s51, %s52
      %p56 = pneg %p50
      %p57 = scmp.eq.s32.totalorder %s15, 1
      %p58 = por %p56, %p57
      %p59 = scmp.ne.s32.totalorder %s51, %s54
      %p60 = scmp.eq.s32.totalorder %s15, 0
      %p61 = por %p59, %p60
      %p62 = scmp.ne.s32.totalorder %s51, %s54
      %p63 = scmp.eq.s32.totalorder %s20, 1
      %p64 = por %p62, %p63
      %p65 = scmp.ne.s32.totalorder %s54, %s55
      %p66 = scmp.eq.s32.totalorder %s20, 0
      %p67 = por %p65, %p66
      %p68 = scmp.ne.s32.totalorder %s54, %s55
      %p69 = scmp.eq.s32.totalorder %s21, 1
      %p70 = por %p68, %p69
      %p72 = scmp.ne.s32.totalorder %s55, %s71
      %p73 = scmp.eq.s32.totalorder %s21, 0
      %p74 = por %p72, %p73
      %s76 = sadd.s32 %s75, 1
      %p79 = scmp.eq.s32.totalorder %s15, 1
      %p80 = scmp.ne.s32.totalorder %s75, %s77
      %p81 = scmp.eq.s32.totalorder %s15, 0
      %p82 = por %p80, %p81
      %p83 = scmp.ne.s32.totalorder %s75, %s77
      %p84 = scmp.eq.s32.totalorder %s20, 1
      %p85 = por %p83, %p84
      %p86 = scmp.ne.s32.totalorder %s77, %s78
      %p87 = scmp.eq.s32.totalorder %s20, 0
      %p88 = por %p86, %p87
      %p89 = scmp.ne.s32.totalorder %s77, %s78
      %p90 = scmp.eq.s32.totalorder %s21, 1
      %p91 = por %p89, %p90
      %p93 = scmp.ne.s32.totalorder %s78, %s92
      %p94 = scmp.eq.s32.totalorder %s21, 0
      %p95 = por %p93, %p94
      %s97 = sadd.s32 %s96, 1
      %p100 = scmp.eq.s32.totalorder %s15, 1
      %p101 = scmp.ne.s32.totalorder %s96, %s98
      %p102 = scmp.eq.s32.totalorder %s15, 0
      %p103 = por %p101, %p102
      %p104 = scmp.ne.s32.totalorder %s96, %s98
      %p105 = scmp.eq.s32.totalorder %s20, 1
      %p106 = por %p104, %p105
      %p107 = scmp.ne.s32.totalorder %s98, %s99
      %p108 = scmp.eq.s32.totalorder %s20, 0
      %p109 = por %p107, %p108
      %p110 = scmp.ne.s32.totalorder %s98, %s99
      %p111 = scmp.eq.s32.totalorder %s21, 1
      %p112 = por %p110, %p111
      %p114 = scmp.ne.s32.totalorder %s99, %s113
      %p115 = scmp.eq.s32.totalorder %s21, 0
      %p116 = por %p114, %p115
      %s118 = sadd.s32 %s117, 1
      %p121 = scmp.eq.s32.totalorder %s15, 1
      %p122 = scmp.ne.s32.totalorder %s117, %s119
      %p123 = scmp.eq.s32.totalorder %s15, 0
      %p124 = por %p122, %p123
      %p125 = scmp.ne.s32.totalorder %s117, %s119
      %p126 = scmp.eq.s32.totalorder %s20, 1
      %p127 = por %p125, %p126
      %p128 = scmp.ne.s32.totalorder %s119, %s120
      %p129 = scmp.eq.s32.totalorder %s20, 0
      %p130 = por %p128, %p129
      %p131 = scmp.ne.s32.totalorder %s119, %s120
      %p132 = scmp.eq.s32.totalorder %s21, 1
      %p133 = por %p131, %p132
      %p135 = scmp.ne.s32.totalorder %s120, %s134
      %p136 = scmp.eq.s32.totalorder %s21, 0
      %p137 = por %p135, %p136
      %s139 = sadd.s32 %s138, 1
      %p142 = scmp.eq.s32.totalorder %s15, 1
      %p143 = scmp.ne.s32.totalorder %s138, %s140
      %p144 = scmp.eq.s32.totalorder %s15, 0
      %p145 = por %p143, %p144
      %p146 = scmp.ne.s32.totalorder %s138, %s140
      %p147 = scmp.eq.s32.totalorder %s20, 1
      %p148 = por %p146, %p147
      %p149 = scmp.ne.s32.totalorder %s140, %s141
      %p150 = scmp.eq.s32.totalorder %s20, 0
      %p151 = por %p149, %p150
      %p152 = scmp.ne.s32.totalorder %s140, %s141
      %p153 = scmp.eq.s32.totalorder %s21, 1
      %p154 = por %p152, %p153
      %p156 = scmp.ne.s32.totalorder %s141, %s155
      %p157 = scmp.eq.s32.totalorder %s21, 0
      %p158 = por %p156, %p157
      %s160 = sadd.s32 %s159, 1
      %p163 = scmp.eq.s32.totalorder %s15, 1
      %p164 = scmp.ne.s32.totalorder %s159, %s161
      %p165 = scmp.eq.s32.totalorder %s15, 0
      %p166 = por %p164, %p165
      %p167 = scmp.ne.s32.totalorder %s159, %s161
      %p168 = scmp.eq.s32.totalorder %s20, 1
      %p169 = por %p167, %p168
      %p170 = scmp.ne.s32.totalorder %s161, %s162
      %p171 = scmp.eq.s32.totalorder %s20, 0
      %p172 = por %p170, %p171
      %p173 = scmp.ne.s32.totalorder %s161, %s162
      %p174 = scmp.eq.s32.totalorder %s21, 1
      %p175 = por %p173, %p174
      %p177 = scmp.ne.s32.totalorder %s162, %s176
      %p178 = scmp.eq.s32.totalorder %s21, 0
      %p179 = por %p177, %p178
      %s181 = sadd.s32 %s180, 1
      %p184 = scmp.eq.s32.totalorder %s15, 1
      %p185 = scmp.ne.s32.totalorder %s180, %s182
      %p186 = scmp.eq.s32.totalorder %s15, 0
      %p187 = por %p185, %p186
      %p188 = scmp.ne.s32.totalorder %s180, %s182
      %p189 = scmp.eq.s32.totalorder %s20, 1
      %p190 = por %p188, %p189
      %p191 = scmp.ne.s32.totalorder %s182, %s183
      %p192 = scmp.eq.s32.totalorder %s20, 0
      %p193 = por %p191, %p192
      %p194 = scmp.ne.s32.totalorder %s182, %s183
      %p195 = scmp.eq.s32.totalorder %s21, 1
      %p196 = por %p194, %p195
      %p198 = scmp.ne.s32.totalorder %s183, %s197
      %p199 = scmp.eq.s32.totalorder %s21, 0
      %p200 = por %p198, %p199
      %s202 = sadd.s32 %s201, 1
      %p205 = scmp.eq.s32.totalorder %s15, 1
      %p206 = scmp.ne.s32.totalorder %s201, %s203
      %p207 = scmp.eq.s32.totalorder %s15, 0
      %p208 = por %p206, %p207
      %p209 = scmp.ne.s32.totalorder %s201, %s203
      %p210 = scmp.eq.s32.totalorder %s20, 1
      %p211 = por %p209, %p210
      %p212 = scmp.ne.s32.totalorder %s203, %s204
      %p213 = scmp.eq.s32.totalorder %s20, 0
      %p214 = por %p212, %p213
      %p215 = scmp.ne.s32.totalorder %s203, %s204
      %p216 = scmp.eq.s32.totalorder %s21, 1
      %p217 = por %p215, %p216
      %p219 = scmp.ne.s32.totalorder %s204, %s218
      %p220 = scmp.eq.s32.totalorder %s21, 0
      %p221 = por %p219, %p220
      %p222 = scmp.le.s32.totalorder 1, %s15
      %p223 = scmp.lt.s32.totalorder %s15, 3
      %p224 = pnand %p222, %p223
      %p225 = pneg %p224
      // Predicated region
      $region9: #{tpu_custom_call.1} parent=5 // pred_check
        _
      $region10: #{tpu_custom_call.1} parent=5 // pred_check_branch
        %227 = sbr.rel (%p224) target = $region12
      $region11: #{tpu_custom_call.1} parent=5 // pred_region
        %s228 = ssub.s32 %s15, 1
        // Predicated region
        $region13: #{tpu_custom_call.1} parent=11 // pred_check
          %p229 = pneg %p88
        $region14: #{tpu_custom_call.1} parent=11 // pred_check_branch
          %231 = sbr.rel (%p229) target = $region16
        $region15: #{tpu_custom_call.1} parent=11 // pred_region
          _
        $region16: #{tpu_custom_call.1} parent=11 // pred_fallthru
          _
        // Predicated region
        $region17: #{tpu_custom_call.1} parent=11 // pred_check
          %p232 = pneg %p109
        $region18: #{tpu_custom_call.1} parent=11 // pred_check_branch
          %234 = sbr.rel (%p232) target = $region20
        $region19: #{tpu_custom_call.1} parent=11 // pred_region
          _
        $region20: #{tpu_custom_call.1} parent=11 // pred_fallthru
          _
        // Predicated region
        $region21: #{tpu_custom_call.1} parent=11 // pred_check
          %p235 = pneg %p130
        $region22: #{tpu_custom_call.1} parent=11 // pred_check_branch
          %237 = sbr.rel (%p235) target = $region24
        $region23: #{tpu_custom_call.1} parent=11 // pred_region
          _
        $region24: #{tpu_custom_call.1} parent=11 // pred_fallthru
          _
        // Predicated region
        $region25: #{tpu_custom_call.1} parent=11 // pred_check
          %p238 = pneg %p151
        $region26: #{tpu_custom_call.1} parent=11 // pred_check_branch
          %240 = sbr.rel (%p238) target = $region28
        $region27: #{tpu_custom_call.1} parent=11 // pred_region
          _
        $region28: #{tpu_custom_call.1} parent=11 // pred_fallthru
          _
        // Predicated region
        $region29: #{tpu_custom_call.1} parent=11 // pred_check
          %p241 = pneg %p172
        $region30: #{tpu_custom_call.1} parent=11 // pred_check_branch
          %243 = sbr.rel (%p241) target = $region32
        $region31: #{tpu_custom_call.1} parent=11 // pred_region
          _
        $region32: #{tpu_custom_call.1} parent=11 // pred_fallthru
          _
        // Predicated region
        $region33: #{tpu_custom_call.1} parent=11 // pred_check
          %p244 = pneg %p193
        $region34: #{tpu_custom_call.1} parent=11 // pred_check_branch
          %246 = sbr.rel (%p244) target = $region36
        $region35: #{tpu_custom_call.1} parent=11 // pred_region
          _
        $region36: #{tpu_custom_call.1} parent=11 // pred_fallthru
          _
      $region12: #{tpu_custom_call.1} parent=5 // pred_fallthru
        _
      %p247 = scmp.lt.s32.totalorder %s15, 2
      // Predicated region
      $region37: #{tpu_custom_call.1} parent=5 // pred_check
        %p248 = pneg %p247
      $region38: #{tpu_custom_call.1} parent=5 // pred_check_branch
        %250 = sbr.rel (%p248) target = $region40
      $region39: #{tpu_custom_call.1} parent=5 // pred_region
        // Predicated region
        $region41: #{tpu_custom_call.1} parent=39 // pred_check
          %p251 = pneg %p35
        $region42: #{tpu_custom_call.1} parent=39 // pred_check_branch
          %253 = sbr.rel (%p251) target = $region44
        $region43: #{tpu_custom_call.1} parent=39 // pred_region
          %p254 = scmp.lt.s32.totalorder %s15, 1
          %s255 = scalar_select %p254, %s15, 1
          %s256 = scalar_lea.vmem %s0, %s255
        $region44: #{tpu_custom_call.1} parent=39 // pred_fallthru
          _
        // Predicated region
        $region45: #{tpu_custom_call.1} parent=39 // pred_check
          %p257 = pneg %p61
        $region46: #{tpu_custom_call.1} parent=39 // pred_check_branch
          %259 = sbr.rel (%p257) target = $region48
        $region47: #{tpu_custom_call.1} parent=39 // pred_region
          %s260 = smul.u32 16, %s15
          %s261 = ssub.s32 18, %s260
          %p262 = scmp.lt.s32.totalorder %s261, 16
          %s263 = scalar_select %p262, %s261, 16
          %s264 = smul.u32 128, %s263
          %p265 = scmp.lt.s32.totalorder %s260, 17
          %s266 = scalar_select %p265, %s260, 17
          %s267 = smul.addr %s266, 8
          %s268 = scalar_lea.vmem %s1, %s267
          %s269 = smul.u32 16, %s15
          %s270 = ssub.s32 18, %s269
          %p271 = scmp.lt.s32.totalorder %s270, 16
          %s272 = scalar_select %p271, %s270, 16
          %s273 = smul.u32 128, %s272
        $region48: #{tpu_custom_call.1} parent=39 // pred_fallthru
          _
      $region40: #{tpu_custom_call.1} parent=5 // pred_fallthru
        _
      %p274 = scmp.le.s32.totalorder 1, %s15
      %p275 = scmp.lt.s32.totalorder %s15, 3
      %p276 = pnand %p274, %p275
      %p277 = pneg %p276
      // Predicated region
      $region49: #{tpu_custom_call.1} parent=5 // pred_check
        _
      $region50: #{tpu_custom_call.1} parent=5 // pred_check_branch
        %279 = sbr.rel (%p276) target = $region52
      $region51: #{tpu_custom_call.1} parent=5 // pred_region
        %s280 = ssub.s32 %s15, 1
        %p281 = scmp.lt.s32.totalorder %s20, 1
        %s282 = scalar_select %p281, %s20, 1
        %s283 = scalar_lea.vmem %s0, %s282
        %p284 = pneg %p41
        %p285 = pneg %p38
        %s286 = smul.u32 16, %s20
        %s287 = ssub.s32 18, %s286
        %p288 = scmp.lt.s32.totalorder %s287, 16
        %s289 = scalar_select %p288, %s287, 16
        %s290 = smul.u32 128, %s289
        %p291 = scmp.lt.s32.totalorder %s286, 17
        %s292 = scalar_select %p291, %s286, 17
        %s293 = smul.addr %s292, 8
        %s294 = scalar_lea.vmem %s1, %s293
        %p295 = pneg %p67
        %p296 = pneg %p64
        %p297 = pneg %p88
        %p298 = pneg %p85
        %p299 = pneg %p109
        %p300 = pneg %p106
        %p301 = pneg %p130
        %p302 = pneg %p127
        %p303 = pneg %p151
        %p304 = pneg %p148
        %p305 = pneg %p172
        %p306 = pneg %p169
        %p307 = pneg %p193
        %p308 = pneg %p190
        %p309 = pneg %p214
        %p310 = pneg %p211
        %p311 = scmp.lt.s32.totalorder %s20, 1
        %s312 = scalar_select %p311, %s20, 1
        %s313 = scalar_lea.vmem %s0, %s312
        %s314 = smul.u32 16, %s20
        %s315 = ssub.s32 18, %s314
        %p316 = scmp.lt.s32.totalorder %s315, 16
        %s317 = scalar_select %p316, %s315, 16
        %s318 = smul.u32 128, %s317
        %p319 = scmp.lt.s32.totalorder %s314, 17
        %s320 = scalar_select %p319, %s314, 17
        %s321 = smul.addr %s320, 8
        %s322 = scalar_lea.vmem %s1, %s321
        %s323 = smul.u32 16, %s20
        %s324 = ssub.s32 18, %s323
        %p325 = scmp.lt.s32.totalorder %s324, 16
        %s326 = scalar_select %p325, %s324, 16
        %s327 = smul.u32 128, %s326
        %p328 = scmp.eq.s32.totalorder %s20, 0
        // Predicated region
        $region53: #{tpu_custom_call.1} parent=51 // pred_check
          %p329 = pneg %p328
        $region54: #{tpu_custom_call.1} parent=51 // pred_check_branch
          %331 = sbr.rel (%p329) target = $region56
        $region55: #{tpu_custom_call.1} parent=51 // pred_region
          %vm332 = vcmask 256000
          %333 = vst.msk [vmem:[#allocation2] sm:$0x7] %vm332, 0.0
          %vm334 = vcmask 2048
          %335 = vst.msk [vmem:[#allocation3] sm:$0x7] %vm334, 0.0
        $region56: #{tpu_custom_call.1} parent=51 // pred_fallthru
          _
        %s336 = smul.u32 %s20, 128
        %v337 = vlaneseq
        %v338 = vand.u32 %v337, 127
        %v339 = vstv %s336
        %v340 = vadd.s32 %v339, %v338
        %vm341 = vcmp.lt.s32.totalorder %v340, 140
        %v342 = vlaneseq
        %v343 = vshrl.u32 %v342, 7
        %v344 = vadd.s32 %v343, 8
        %v345 = vadd.s32 %v343, 16
        %v346 = vadd.s32 %v343, 24
        %v347 = vadd.s32 %v343, 32
        %v348 = vadd.s32 %v343, 40
        %v349 = vadd.s32 %v343, 48
        %v350 = vadd.s32 %v343, 56
        %v351 = vadd.s32 %v343, 64
        %v352 = vadd.s32 %v343, 72
        %v353 = vadd.s32 %v343, 80
        %v354 = vadd.s32 %v343, 88
        %v355 = vadd.s32 %v343, 96
        %v356 = vadd.s32 %v343, 104
        %v357 = vadd.s32 %v343, 112
        %v358 = vadd.s32 %v343, 120
        %v359 = vadd.s32 %v339, %v343
        %v360 = vadd.s32 %v339, %v344
        %v361 = vadd.s32 %v339, %v345
        %v362 = vadd.s32 %v339, %v346
        %v363 = vadd.s32 %v339, %v347
        %v364 = vadd.s32 %v339, %v348
        %v365 = vadd.s32 %v339, %v349
        %v366 = vadd.s32 %v339, %v350
        %v367 = vadd.s32 %v339, %v351
        %v368 = vadd.s32 %v339, %v352
        %v369 = vadd.s32 %v339, %v353
        %v370 = vadd.s32 %v339, %v354
        %v371 = vadd.s32 %v339, %v355
        %v372 = vadd.s32 %v339, %v356
        %v373 = vadd.s32 %v339, %v357
        %v374 = vadd.s32 %v339, %v358
        %vm375 = vcmp.lt.s32.totalorder %v359, 140
        %vm376 = vcmp.lt.s32.totalorder %v360, 140
        %vm377 = vcmp.lt.s32.totalorder %v361, 140
        %vm378 = vcmp.lt.s32.totalorder %v362, 140
        %vm379 = vcmp.lt.s32.totalorder %v363, 140
        %vm380 = vcmp.lt.s32.totalorder %v364, 140
        %vm381 = vcmp.lt.s32.totalorder %v365, 140
        %vm382 = vcmp.lt.s32.totalorder %v366, 140
        %vm383 = vcmp.lt.s32.totalorder %v367, 140
        %vm384 = vcmp.lt.s32.totalorder %v368, 140
        %vm385 = vcmp.lt.s32.totalorder %v369, 140
        %vm386 = vcmp.lt.s32.totalorder %v370, 140
        %vm387 = vcmp.lt.s32.totalorder %v371, 140
        %vm388 = vcmp.lt.s32.totalorder %v372, 140
        %vm389 = vcmp.lt.s32.totalorder %v373, 140
        %vm390 = vcmp.lt.s32.totalorder %v374, 140
        %v391 = vld [vmem:[%s313] sm:$0x1]
        %v392 = vsel %vm341, %v391, 3
        %v393 = vlaneseq
        %v394 = vshrl.u32 %v393, 7
        %v395 = vsub.s32 0, %v394
        %v396 = vrot.slane %v392, %v395
        %vm397 = vcmp.eq.s32.totalorder %v396, %v343
        %v398 = vsel %vm397, 1, 0
        %v399 = vcvt.s32.f32 %v398
        %v400 = vld [vmem:[%s322] sm:$0xff]
        %v401 = vld [vmem:[%s322 + $0x8] sm:$0xff]
        %v402 = vld [vmem:[%s322 + $0x10] sm:$0xff]
        %v403 = vld [vmem:[%s322 + $0x18] sm:$0xff]
        %v404 = vld [vmem:[%s322 + $0x20] sm:$0xff]
        %v405 = vld [vmem:[%s322 + $0x28] sm:$0xff]
        %v406 = vld [vmem:[%s322 + $0x30] sm:$0xff]
        %v407 = vld [vmem:[%s322 + $0x38] sm:$0xff]
        %v408 = vld [vmem:[%s322 + $0x40] sm:$0xff]
        %v409 = vld [vmem:[%s322 + $0x48] sm:$0xff]
        %v410 = vld [vmem:[%s322 + $0x50] sm:$0xff]
        %v411 = vld [vmem:[%s322 + $0x58] sm:$0xff]
        %v412 = vld [vmem:[%s322 + $0x60] sm:$0xff]
        %v413 = vld [vmem:[%s322 + $0x68] sm:$0xff]
        %v414 = vld [vmem:[%s322 + $0x70] sm:$0xff]
        %v415 = vld [vmem:[%s322 + $0x78] sm:$0xff]
        %v416 = vsel %vm375, 1, 0
        %v417 = vsel %vm376, 1, 0
        %v418 = vsel %vm377, 1, 0
        %v419 = vsel %vm378, 1, 0
        %v420 = vsel %vm379, 1, 0
        %v421 = vsel %vm380, 1, 0
        %v422 = vsel %vm381, 1, 0
        %v423 = vsel %vm382, 1, 0
        %v424 = vsel %vm383, 1, 0
        %v425 = vsel %vm384, 1, 0
        %v426 = vsel %vm385, 1, 0
        %v427 = vsel %vm386, 1, 0
        %v428 = vsel %vm387, 1, 0
        %v429 = vsel %vm388, 1, 0
        %v430 = vsel %vm389, 1, 0
        %v431 = vsel %vm390, 1, 0
        %vm432 = vcmp.eq.s32.totalorder %v416, 1
        %vm433 = vcmp.eq.s32.totalorder %v417, 1
        %vm434 = vcmp.eq.s32.totalorder %v418, 1
        %vm435 = vcmp.eq.s32.totalorder %v419, 1
        %vm436 = vcmp.eq.s32.totalorder %v420, 1
        %vm437 = vcmp.eq.s32.totalorder %v421, 1
        %vm438 = vcmp.eq.s32.totalorder %v422, 1
        %vm439 = vcmp.eq.s32.totalorder %v423, 1
        %vm440 = vcmp.eq.s32.totalorder %v424, 1
        %vm441 = vcmp.eq.s32.totalorder %v425, 1
        %vm442 = vcmp.eq.s32.totalorder %v426, 1
        %vm443 = vcmp.eq.s32.totalorder %v427, 1
        %vm444 = vcmp.eq.s32.totalorder %v428, 1
        %vm445 = vcmp.eq.s32.totalorder %v429, 1
        %vm446 = vcmp.eq.s32.totalorder %v430, 1
        %vm447 = vcmp.eq.s32.totalorder %v431, 1
        %v448 = vsel %vm432, %v400, 0.0
        %v449 = vsel %vm433, %v401, 0.0
        %v450 = vsel %vm434, %v402, 0.0
        %v451 = vsel %vm435, %v403, 0.0
        %v452 = vsel %vm436, %v404, 0.0
        %v453 = vsel %vm437, %v405, 0.0
        %v454 = vsel %vm438, %v406, 0.0
        %v455 = vsel %vm439, %v407, 0.0
        %v456 = vsel %vm440, %v408, 0.0
        %v457 = vsel %vm441, %v409, 0.0
        %v458 = vsel %vm442, %v410, 0.0
        %v459 = vsel %vm443, %v411, 0.0
        %v460 = vsel %vm444, %v412, 0.0
        %v461 = vsel %vm445, %v413, 0.0
        %v462 = vsel %vm446, %v414, 0.0
        %v463 = vsel %vm447, %v415, 0.0
        %v464 = vld [vmem:[#allocation2] sm:$0x7]
        %465 = vmatprep.subr.mxu0 0.0
        %v466 = vand.u32 %v463, 4294901760
        %467 = vmatpush1.msra.mxu0 %v466
        %468 = vmatprep.subr.mxu0 0.0
        %v469 = vand.u32 %v462, 4294901760
        %470 = vmatpush1.msra.mxu0 %v469
        %471 = vmatprep.subr.mxu0 0.0
        %v472 = vand.u32 %v461, 4294901760
        %473 = vmatpush1.msra.mxu0 %v472
        %474 = vmatprep.subr.mxu0 0.0
        %v475 = vand.u32 %v460, 4294901760
        %476 = vmatpush1.msra.mxu0 %v475
        %477 = vmatprep.subr.mxu0 0.0
        %v478 = vand.u32 %v459, 4294901760
        %479 = vmatpush1.msra.mxu0 %v478
        %480 = vmatprep.subr.mxu0 0.0
        %v481 = vand.u32 %v458, 4294901760
        %482 = vmatpush1.msra.mxu0 %v481
        %483 = vmatprep.subr.mxu0 0.0
        %v484 = vand.u32 %v457, 4294901760
        %485 = vmatpush1.msra.mxu0 %v484
        %486 = vmatprep.subr.mxu0 0.0
        %v487 = vand.u32 %v456, 4294901760
        %488 = vmatpush1.msra.mxu0 %v487
        %489 = vmatprep.subr.mxu0 0.0
        %v490 = vand.u32 %v455, 4294901760
        %491 = vmatpush1.msra.mxu0 %v490
        %492 = vmatprep.subr.mxu0 0.0
        %v493 = vand.u32 %v454, 4294901760
        %494 = vmatpush1.msra.mxu0 %v493
        %495 = vmatprep.subr.mxu0 0.0
        %v496 = vand.u32 %v453, 4294901760
        %497 = vmatpush1.msra.mxu0 %v496
        %498 = vmatprep.subr.mxu0 0.0
        %v499 = vand.u32 %v452, 4294901760
        %500 = vmatpush1.msra.mxu0 %v499
        %501 = vmatprep.subr.mxu0 0.0
        %v502 = vand.u32 %v451, 4294901760
        %503 = vmatpush1.msra.mxu0 %v502
        %504 = vmatprep.subr.mxu0 0.0
        %v505 = vand.u32 %v450, 4294901760
        %506 = vmatpush1.msra.mxu0 %v505
        %507 = vmatprep.subr.mxu0 0.0
        %v508 = vand.u32 %v449, 4294901760
        %509 = vmatpush1.msra.mxu0 %v508
        %510 = vmatprep.subr.mxu0 0.0
        %v511 = vand.u32 %v448, 4294901760
        %512 = vmatpush1.msra.mxu0 %v511
        %513 = vmatprep.subr.mxu0 0.0
        %514 = vmatpush2.msra.mxu0 0.0
        %515 = vmatprep.subr.mxu0 0.0
        %516 = vmatpush2.msra.mxu0 0.0
        %517 = vmatprep.subr.mxu0 0.0
        %518 = vmatpush2.msra.mxu0 0.0
        %519 = vmatprep.subr.mxu0 0.0
        %520 = vmatpush2.msra.mxu0 0.0
        %521 = vmatprep.subr.mxu0 0.0
        %522 = vmatpush2.msra.mxu0 0.0
        %523 = vmatprep.subr.mxu0 0.0
        %524 = vmatpush2.msra.mxu0 0.0
        %525 = vmatprep.subr.mxu0 0.0
        %526 = vmatpush2.msra.mxu0 0.0
        %527 = vmatprep.subr.mxu0 0.0
        %528 = vmatpush2.msra.mxu0 0.0
        %529 = vmatprep.subr.mxu0 0.0
        %530 = vmatpush2.msra.mxu0 0.0
        %531 = vmatprep.subr.mxu0 0.0
        %532 = vmatpush2.msra.mxu0 0.0
        %533 = vmatprep.subr.mxu0 0.0
        %534 = vmatpush2.msra.mxu0 0.0
        %535 = vmatprep.subr.mxu0 0.0
        %536 = vmatpush2.msra.mxu0 0.0
        %537 = vmatprep.subr.mxu0 0.0
        %538 = vmatpush2.msra.mxu0 0.0
        %539 = vmatprep.subr.mxu0 0.0
        %540 = vmatpush2.msra.mxu0 0.0
        %541 = vmatprep.subr.mxu0 0.0
        %542 = vmatpush2.msra.mxu0 0.0
        %543 = vmatprep.subr.mxu0 0.0
        %544 = vmatpush2.msra.mxu0 0.0
        %545 = vmatprep.mubr.f32.mxu0 0.0
        %v546 = vand.u32 %v399, 4294901760
        %v547 = vsub.f32 %v399, %v546
        %v548 = vand.u32 %v547, 4294901760
        %v549 = vsub.f32 %v547, %v548
        %v550 = vand.u32 %v549, 4294901760
        %551 = vmatmul.mubr.f32.gmra.mxu0 %v550
        %v552 = vpop.f32.mrf.mxu0
        %v553 = vadd.f32 0.0, %v552
        %v554 = vpop.f32.mrf.mxu0
        %555 = vdwg.mxu0
        %556 = vmatprep.subr.mxu0 0.0
        %v557 = vand.u32 %v463, 4294901760
        %v558 = vsub.f32 %v463, %v557
        %v559 = vand.u32 %v558, 4294901760
        %v560 = vsub.f32 %v558, %v559
        %v561 = vand.u32 %v560, 4294901760
        %562 = vmatpush1.msra.mxu0 %v561
        %563 = vmatprep.subr.mxu0 0.0
        %v564 = vand.u32 %v462, 4294901760
        %v565 = vsub.f32 %v462, %v564
        %v566 = vand.u32 %v565, 4294901760
        %v567 = vsub.f32 %v565, %v566
        %v568 = vand.u32 %v567, 4294901760
        %569 = vmatpush1.msra.mxu0 %v568
        %570 = vmatprep.subr.mxu0 0.0
        %v571 = vand.u32 %v461, 4294901760
        %v572 = vsub.f32 %v461, %v571
        %v573 = vand.u32 %v572, 4294901760
        %v574 = vsub.f32 %v572, %v573
        %v575 = vand.u32 %v574, 4294901760
        %576 = vmatpush1.msra.mxu0 %v575
        %577 = vmatprep.subr.mxu0 0.0
        %v578 = vand.u32 %v460, 4294901760
        %v579 = vsub.f32 %v460, %v578
        %v580 = vand.u32 %v579, 4294901760
        %v581 = vsub.f32 %v579, %v580
        %v582 = vand.u32 %v581, 4294901760
        %583 = vmatpush1.msra.mxu0 %v582
        %584 = vmatprep.subr.mxu0 0.0
        %v585 = vand.u32 %v459, 4294901760
        %v586 = vsub.f32 %v459, %v585
        %v587 = vand.u32 %v586, 4294901760
        %v588 = vsub.f32 %v586, %v587
        %v589 = vand.u32 %v588, 4294901760
        %590 = vmatpush1.msra.mxu0 %v589
        %591 = vmatprep.subr.mxu0 0.0
        %v592 = vand.u32 %v458, 4294901760
        %v593 = vsub.f32 %v458, %v592
        %v594 = vand.u32 %v593, 4294901760
        %v595 = vsub.f32 %v593, %v594
        %v596 = vand.u32 %v595, 4294901760
        %597 = vmatpush1.msra.mxu0 %v596
        %598 = vmatprep.subr.mxu0 0.0
        %v599 = vand.u32 %v457, 4294901760
        %v600 = vsub.f32 %v457, %v599
        %v601 = vand.u32 %v600, 4294901760
        %v602 = vsub.f32 %v600, %v601
        %v603 = vand.u32 %v602, 4294901760
        %604 = vmatpush1.msra.mxu0 %v603
        %605 = vmatprep.subr.mxu0 0.0
        %v606 = vand.u32 %v456, 4294901760
        %v607 = vsub.f32 %v456, %v606
        %v608 = vand.u32 %v607, 4294901760
        %v609 = vsub.f32 %v607, %v608
        %v610 = vand.u32 %v609, 4294901760
        %611 = vmatpush1.msra.mxu0 %v610
        %612 = vmatprep.subr.mxu0 0.0
        %v613 = vand.u32 %v455, 4294901760
        %v614 = vsub.f32 %v455, %v613
        %v615 = vand.u32 %v614, 4294901760
        %v616 = vsub.f32 %v614, %v615
        %v617 = vand.u32 %v616, 4294901760
        %618 = vmatpush1.msra.mxu0 %v617
        %619 = vmatprep.subr.mxu0 0.0
        %v620 = vand.u32 %v454, 4294901760
        %v621 = vsub.f32 %v454, %v620
        %v622 = vand.u32 %v621, 4294901760
        %v623 = vsub.f32 %v621, %v622
        %v624 = vand.u32 %v623, 4294901760
        %625 = vmatpush1.msra.mxu0 %v624
        %626 = vmatprep.subr.mxu0 0.0
        %v627 = vand.u32 %v453, 4294901760
        %v628 = vsub.f32 %v453, %v627
        %v629 = vand.u32 %v628, 4294901760
        %v630 = vsub.f32 %v628, %v629
        %v631 = vand.u32 %v630, 4294901760
        %632 = vmatpush1.msra.mxu0 %v631
        %633 = vmatprep.subr.mxu0 0.0
        %v634 = vand.u32 %v452, 4294901760
        %v635 = vsub.f32 %v452, %v634
        %v636 = vand.u32 %v635, 4294901760
        %v637 = vsub.f32 %v635, %v636
        %v638 = vand.u32 %v637, 4294901760
        %639 = vmatpush1.msra.mxu0 %v638
        %640 = vmatprep.subr.mxu0 0.0
        %v641 = vand.u32 %v451, 4294901760
        %v642 = vsub.f32 %v451, %v641
        %v643 = vand.u32 %v642, 4294901760
        %v644 = vsub.f32 %v642, %v643
        %v645 = vand.u32 %v644, 4294901760
        %646 = vmatpush1.msra.mxu0 %v645
        %647 = vmatprep.subr.mxu0 0.0
        %v648 = vand.u32 %v450, 4294901760
        %v649 = vsub.f32 %v450, %v648
        %v650 = vand.u32 %v649, 4294901760
        %v651 = vsub.f32 %v649, %v650
        %v652 = vand.u32 %v651, 4294901760
        %653 = vmatpush1.msra.mxu0 %v652
        %654 = vmatprep.subr.mxu0 0.0
        %v655 = vand.u32 %v449, 4294901760
        %v656 = vsub.f32 %v449, %v655
        %v657 = vand.u32 %v656, 4294901760
        %v658 = vsub.f32 %v656, %v657
        %v659 = vand.u32 %v658, 4294901760
        %660 = vmatpush1.msra.mxu0 %v659
        %661 = vmatprep.subr.mxu0 0.0
        %v662 = vand.u32 %v448, 4294901760
        %v663 = vsub.f32 %v448, %v662
        %v664 = vand.u32 %v663, 4294901760
        %v665 = vsub.f32 %v663, %v664
        %v666 = vand.u32 %v665, 4294901760
        %667 = vmatpush1.msra.mxu0 %v666
        %668 = vmatprep.subr.mxu0 0.0
        %669 = vmatpush2.msra.mxu0 0.0
        %670 = vmatprep.subr.mxu0 0.0
        %671 = vmatpush2.msra.mxu0 0.0
        %672 = vmatprep.subr.mxu0 0.0
        %673 = vmatpush2.msra.mxu0 0.0
        %674 = vmatprep.subr.mxu0 0.0
        %675 = vmatpush2.msra.mxu0 0.0
        %676 = vmatprep.subr.mxu0 0.0
        %677 = vmatpush2.msra.mxu0 0.0
        %678 = vmatprep.subr.mxu0 0.0
        %679 = vmatpush2.msra.mxu0 0.0
        %680 = vmatprep.subr.mxu0 0.0
        %681 = vmatpush2.msra.mxu0 0.0
        %682 = vmatprep.subr.mxu0 0.0
        %683 = vmatpush2.msra.mxu0 0.0
        %684 = vmatprep.subr.mxu0 0.0
        %685 = vmatpush2.msra.mxu0 0.0
        %686 = vmatprep.subr.mxu0 0.0
        %687 = vmatpush2.msra.mxu0 0.0
        %688 = vmatprep.subr.mxu0 0.0
        %689 = vmatpush2.msra.mxu0 0.0
        %690 = vmatprep.subr.mxu0 0.0
        %691 = vmatpush2.msra.mxu0 0.0
        %692 = vmatprep.subr.mxu0 0.0
        %693 = vmatpush2.msra.mxu0 0.0
        %694 = vmatprep.subr.mxu0 0.0
        %695 = vmatpush2.msra.mxu0 0.0
        %696 = vmatprep.subr.mxu0 0.0
        %697 = vmatpush2.msra.mxu0 0.0
        %698 = vmatprep.subr.mxu0 0.0
        %699 = vmatpush2.msra.mxu0 0.0
        %700 = vmatprep.mubr.f32.mxu0 0.0
        %v701 = vand.u32 %v399, 4294901760
        %702 = vmatmul.mubr.f32.gmra.mxu0 %v701
        %v703 = vpop.f32.mrf.mxu0
        %v704 = vadd.f32 %v553, %v703
        %v705 = vpop.f32.mrf.mxu0
        %706 = vdwg.mxu0
        %707 = vmatprep.subr.mxu0 0.0
        %v708 = vand.u32 %v463, 4294901760
        %v709 = vsub.f32 %v463, %v708
        %710 = vmatpush1.msra.mxu0 %v709
        %711 = vmatprep.subr.mxu0 0.0
        %v712 = vand.u32 %v462, 4294901760
        %v713 = vsub.f32 %v462, %v712
        %714 = vmatpush1.msra.mxu0 %v713
        %715 = vmatprep.subr.mxu0 0.0
        %v716 = vand.u32 %v461, 4294901760
        %v717 = vsub.f32 %v461, %v716
        %718 = vmatpush1.msra.mxu0 %v717
        %719 = vmatprep.subr.mxu0 0.0
        %v720 = vand.u32 %v460, 4294901760
        %v721 = vsub.f32 %v460, %v720
        %722 = vmatpush1.msra.mxu0 %v721
        %723 = vmatprep.subr.mxu0 0.0
        %v724 = vand.u32 %v459, 4294901760
        %v725 = vsub.f32 %v459, %v724
        %726 = vmatpush1.msra.mxu0 %v725
        %727 = vmatprep.subr.mxu0 0.0
        %v728 = vand.u32 %v458, 4294901760
        %v729 = vsub.f32 %v458, %v728
        %730 = vmatpush1.msra.mxu0 %v729
        %731 = vmatprep.subr.mxu0 0.0
        %v732 = vand.u32 %v457, 4294901760
        %v733 = vsub.f32 %v457, %v732
        %734 = vmatpush1.msra.mxu0 %v733
        %735 = vmatprep.subr.mxu0 0.0
        %v736 = vand.u32 %v456, 4294901760
        %v737 = vsub.f32 %v456, %v736
        %738 = vmatpush1.msra.mxu0 %v737
        %739 = vmatprep.subr.mxu0 0.0
        %v740 = vand.u32 %v455, 4294901760
        %v741 = vsub.f32 %v455, %v740
        %742 = vmatpush1.msra.mxu0 %v741
        %743 = vmatprep.subr.mxu0 0.0
        %v744 = vand.u32 %v454, 4294901760
        %v745 = vsub.f32 %v454, %v744
        %746 = vmatpush1.msra.mxu0 %v745
        %747 = vmatprep.subr.mxu0 0.0
        %v748 = vand.u32 %v453, 4294901760
        %v749 = vsub.f32 %v453, %v748
        %750 = vmatpush1.msra.mxu0 %v749
        %751 = vmatprep.subr.mxu0 0.0
        %v752 = vand.u32 %v452, 4294901760
        %v753 = vsub.f32 %v452, %v752
        %754 = vmatpush1.msra.mxu0 %v753
        %755 = vmatprep.subr.mxu0 0.0
        %v756 = vand.u32 %v451, 4294901760
        %v757 = vsub.f32 %v451, %v756
        %758 = vmatpush1.msra.mxu0 %v757
        %759 = vmatprep.subr.mxu0 0.0
        %v760 = vand.u32 %v450, 4294901760
        %v761 = vsub.f32 %v450, %v760
        %762 = vmatpush1.msra.mxu0 %v761
        %763 = vmatprep.subr.mxu0 0.0
        %v764 = vand.u32 %v449, 4294901760
        %v765 = vsub.f32 %v449, %v764
        %766 = vmatpush1.msra.mxu0 %v765
        %767 = vmatprep.subr.mxu0 0.0
        %v768 = vand.u32 %v448, 4294901760
        %v769 = vsub.f32 %v448, %v768
        %770 = vmatpush1.msra.mxu0 %v769
        %771 = vmatprep.subr.mxu0 0.0
        %772 = vmatpush2.msra.mxu0 0.0
        %773 = vmatprep.subr.mxu0 0.0
        %774 = vmatpush2.msra.mxu0 0.0
        %775 = vmatprep.subr.mxu0 0.0
        %776 = vmatpush2.msra.mxu0 0.0
        %777 = vmatprep.subr.mxu0 0.0
        %778 = vmatpush2.msra.mxu0 0.0
        %779 = vmatprep.subr.mxu0 0.0
        %780 = vmatpush2.msra.mxu0 0.0
        %781 = vmatprep.subr.mxu0 0.0
        %782 = vmatpush2.msra.mxu0 0.0
        %783 = vmatprep.subr.mxu0 0.0
        %784 = vmatpush2.msra.mxu0 0.0
        %785 = vmatprep.subr.mxu0 0.0
        %786 = vmatpush2.msra.mxu0 0.0
        %787 = vmatprep.subr.mxu0 0.0
        %788 = vmatpush2.msra.mxu0 0.0
        %789 = vmatprep.subr.mxu0 0.0
        %790 = vmatpush2.msra.mxu0 0.0
        %791 = vmatprep.subr.mxu0 0.0
        %792 = vmatpush2.msra.mxu0 0.0
        %793 = vmatprep.subr.mxu0 0.0
        %794 = vmatpush2.msra.mxu0 0.0
        %795 = vmatprep.subr.mxu0 0.0
        %796 = vmatpush2.msra.mxu0 0.0
        %797 = vmatprep.subr.mxu0 0.0
        %798 = vmatpush2.msra.mxu0 0.0
        %799 = vmatprep.subr.mxu0 0.0
        %800 = vmatpush2.msra.mxu0 0.0
        %801 = vmatprep.subr.mxu0 0.0
        %802 = vmatpush2.msra.mxu0 0.0
        %803 = vmatprep.mubr.f32.mxu0 0.0
        %v804 = vand.u32 %v399, 4294901760
        %v805 = vsub.f32 %v399, %v804
        %806 = vmatmul.mubr.f32.gmra.mxu0 %v805
        %v807 = vpop.f32.mrf.mxu0
        %v808 = vadd.f32 %v704, %v807
        %v809 = vpop.f32.mrf.mxu0
        %810 = vdwg.mxu0
        %811 = vmatprep.subr.mxu0 0.0
        %v812 = vand.u32 %v463, 4294901760
        %813 = vmatpush1.msra.mxu0 %v812
        %814 = vmatprep.subr.mxu0 0.0
        %v815 = vand.u32 %v462, 4294901760
        %816 = vmatpush1.msra.mxu0 %v815
        %817 = vmatprep.subr.mxu0 0.0
        %v818 = vand.u32 %v461, 4294901760
        %819 = vmatpush1.msra.mxu0 %v818
        %820 = vmatprep.subr.mxu0 0.0
        %v821 = vand.u32 %v460, 4294901760
        %822 = vmatpush1.msra.mxu0 %v821
        %823 = vmatprep.subr.mxu0 0.0
        %v824 = vand.u32 %v459, 4294901760
        %825 = vmatpush1.msra.mxu0 %v824
        %826 = vmatprep.subr.mxu0 0.0
        %v827 = vand.u32 %v458, 4294901760
        %828 = vmatpush1.msra.mxu0 %v827
        %829 = vmatprep.subr.mxu0 0.0
        %v830 = vand.u32 %v457, 4294901760
        %831 = vmatpush1.msra.mxu0 %v830
        %832 = vmatprep.subr.mxu0 0.0
        %v833 = vand.u32 %v456, 4294901760
        %834 = vmatpush1.msra.mxu0 %v833
        %835 = vmatprep.subr.mxu0 0.0
        %v836 = vand.u32 %v455, 4294901760
        %837 = vmatpush1.msra.mxu0 %v836
        %838 = vmatprep.subr.mxu0 0.0
        %v839 = vand.u32 %v454, 4294901760
        %840 = vmatpush1.msra.mxu0 %v839
        %841 = vmatprep.subr.mxu0 0.0
        %v842 = vand.u32 %v453, 4294901760
        %843 = vmatpush1.msra.mxu0 %v842
        %844 = vmatprep.subr.mxu0 0.0
        %v845 = vand.u32 %v452, 4294901760
        %846 = vmatpush1.msra.mxu0 %v845
        %847 = vmatprep.subr.mxu0 0.0
        %v848 = vand.u32 %v451, 4294901760
        %849 = vmatpush1.msra.mxu0 %v848
        %850 = vmatprep.subr.mxu0 0.0
        %v851 = vand.u32 %v450, 4294901760
        %852 = vmatpush1.msra.mxu0 %v851
        %853 = vmatprep.subr.mxu0 0.0
        %v854 = vand.u32 %v449, 4294901760
        %855 = vmatpush1.msra.mxu0 %v854
        %856 = vmatprep.subr.mxu0 0.0
        %v857 = vand.u32 %v448, 4294901760
        %858 = vmatpush1.msra.mxu0 %v857
        %859 = vmatprep.subr.mxu0 0.0
        %860 = vmatpush2.msra.mxu0 0.0
        %861 = vmatprep.subr.mxu0 0.0
        %862 = vmatpush2.msra.mxu0 0.0
        %863 = vmatprep.subr.mxu0 0.0
        %864 = vmatpush2.msra.mxu0 0.0
        %865 = vmatprep.subr.mxu0 0.0
        %866 = vmatpush2.msra.mxu0 0.0
        %867 = vmatprep.subr.mxu0 0.0
        %868 = vmatpush2.msra.mxu0 0.0
        %869 = vmatprep.subr.mxu0 0.0
        %870 = vmatpush2.msra.mxu0 0.0
        %871 = vmatprep.subr.mxu0 0.0
        %872 = vmatpush2.msra.mxu0 0.0
        %873 = vmatprep.subr.mxu0 0.0
        %874 = vmatpush2.msra.mxu0 0.0
        %875 = vmatprep.subr.mxu0 0.0
        %876 = vmatpush2.msra.mxu0 0.0
        %877 = vmatprep.subr.mxu0 0.0
        %878 = vmatpush2.msra.mxu0 0.0
        %879 = vmatprep.subr.mxu0 0.0
        %880 = vmatpush2.msra.mxu0 0.0
        %881 = vmatprep.subr.mxu0 0.0
        %882 = vmatpush2.msra.mxu0 0.0
        %883 = vmatprep.subr.mxu0 0.0
        %884 = vmatpush2.msra.mxu0 0.0
        %885 = vmatprep.subr.mxu0 0.0
        %886 = vmatpush2.msra.mxu0 0.0
        %887 = vmatprep.subr.mxu0 0.0
        %888 = vmatpush2.msra.mxu0 0.0
        %889 = vmatprep.subr.mxu0 0.0
        %890 = vmatpush2.msra.mxu0 0.0
        %891 = vmatprep.mubr.f32.mxu0 0.0
        %v892 = vand.u32 %v399, 4294901760
        %v893 = vsub.f32 %v399, %v892
        %v894 = vand.u32 %v893, 4294901760
        %895 = vmatmul.mubr.f32.gmra.mxu0 %v894
        %v896 = vpop.f32.mrf.mxu0
        %v897 = vadd.f32 %v808, %v896
        %v898 = vpop.f32.mrf.mxu0
        %899 = vdwg.mxu0
        %900 = vmatprep.subr.mxu0 0.0
        %v901 = vand.u32 %v463, 4294901760
        %v902 = vsub.f32 %v463, %v901
        %v903 = vand.u32 %v902, 4294901760
        %904 = vmatpush1.msra.mxu0 %v903
        %905 = vmatprep.subr.mxu0 0.0
        %v906 = vand.u32 %v462, 4294901760
        %v907 = vsub.f32 %v462, %v906
        %v908 = vand.u32 %v907, 4294901760
        %909 = vmatpush1.msra.mxu0 %v908
        %910 = vmatprep.subr.mxu0 0.0
        %v911 = vand.u32 %v461, 4294901760
        %v912 = vsub.f32 %v461, %v911
        %v913 = vand.u32 %v912, 4294901760
        %914 = vmatpush1.msra.mxu0 %v913
        %915 = vmatprep.subr.mxu0 0.0
        %v916 = vand.u32 %v460, 4294901760
        %v917 = vsub.f32 %v460, %v916
        %v918 = vand.u32 %v917, 4294901760
        %919 = vmatpush1.msra.mxu0 %v918
        %920 = vmatprep.subr.mxu0 0.0
        %v921 = vand.u32 %v459, 4294901760
        %v922 = vsub.f32 %v459, %v921
        %v923 = vand.u32 %v922, 4294901760
        %924 = vmatpush1.msra.mxu0 %v923
        %925 = vmatprep.subr.mxu0 0.0
        %v926 = vand.u32 %v458, 4294901760
        %v927 = vsub.f32 %v458, %v926
        %v928 = vand.u32 %v927, 4294901760
        %929 = vmatpush1.msra.mxu0 %v928
        %930 = vmatprep.subr.mxu0 0.0
        %v931 = vand.u32 %v457, 4294901760
        %v932 = vsub.f32 %v457, %v931
        %v933 = vand.u32 %v932, 4294901760
        %934 = vmatpush1.msra.mxu0 %v933
        %935 = vmatprep.subr.mxu0 0.0
        %v936 = vand.u32 %v456, 4294901760
        %v937 = vsub.f32 %v456, %v936
        %v938 = vand.u32 %v937, 4294901760
        %939 = vmatpush1.msra.mxu0 %v938
        %940 = vmatprep.subr.mxu0 0.0
        %v941 = vand.u32 %v455, 4294901760
        %v942 = vsub.f32 %v455, %v941
        %v943 = vand.u32 %v942, 4294901760
        %944 = vmatpush1.msra.mxu0 %v943
        %945 = vmatprep.subr.mxu0 0.0
        %v946 = vand.u32 %v454, 4294901760
        %v947 = vsub.f32 %v454, %v946
        %v948 = vand.u32 %v947, 4294901760
        %949 = vmatpush1.msra.mxu0 %v948
        %950 = vmatprep.subr.mxu0 0.0
        %v951 = vand.u32 %v453, 4294901760
        %v952 = vsub.f32 %v453, %v951
        %v953 = vand.u32 %v952, 4294901760
        %954 = vmatpush1.msra.mxu0 %v953
        %955 = vmatprep.subr.mxu0 0.0
        %v956 = vand.u32 %v452, 4294901760
        %v957 = vsub.f32 %v452, %v956
        %v958 = vand.u32 %v957, 4294901760
        %959 = vmatpush1.msra.mxu0 %v958
        %960 = vmatprep.subr.mxu0 0.0
        %v961 = vand.u32 %v451, 4294901760
        %v962 = vsub.f32 %v451, %v961
        %v963 = vand.u32 %v962, 4294901760
        %964 = vmatpush1.msra.mxu0 %v963
        %965 = vmatprep.subr.mxu0 0.0
        %v966 = vand.u32 %v450, 4294901760
        %v967 = vsub.f32 %v450, %v966
        %v968 = vand.u32 %v967, 4294901760
        %969 = vmatpush1.msra.mxu0 %v968
        %970 = vmatprep.subr.mxu0 0.0
        %v971 = vand.u32 %v449, 4294901760
        %v972 = vsub.f32 %v449, %v971
        %v973 = vand.u32 %v972, 4294901760
        %974 = vmatpush1.msra.mxu0 %v973
        %975 = vmatprep.subr.mxu0 0.0
        %v976 = vand.u32 %v448, 4294901760
        %v977 = vsub.f32 %v448, %v976
        %v978 = vand.u32 %v977, 4294901760
        %979 = vmatpush1.msra.mxu0 %v978
        %980 = vmatprep.subr.mxu0 0.0
        %981 = vmatpush2.msra.mxu0 0.0
        %982 = vmatprep.subr.mxu0 0.0
        %983 = vmatpush2.msra.mxu0 0.0
        %984 = vmatprep.subr.mxu0 0.0
        %985 = vmatpush2.msra.mxu0 0.0
        %986 = vmatprep.subr.mxu0 0.0
        %987 = vmatpush2.msra.mxu0 0.0
        %988 = vmatprep.subr.mxu0 0.0
        %989 = vmatpush2.msra.mxu0 0.0
        %990 = vmatprep.subr.mxu0 0.0
        %991 = vmatpush2.msra.mxu0 0.0
        %992 = vmatprep.subr.mxu0 0.0
        %993 = vmatpush2.msra.mxu0 0.0
        %994 = vmatprep.subr.mxu0 0.0
        %995 = vmatpush2.msra.mxu0 0.0
        %996 = vmatprep.subr.mxu0 0.0
        %997 = vmatpush2.msra.mxu0 0.0
        %998 = vmatprep.subr.mxu0 0.0
        %999 = vmatpush2.msra.mxu0 0.0
        %1000 = vmatprep.subr.mxu0 0.0
        %1001 = vmatpush2.msra.mxu0 0.0
        %1002 = vmatprep.subr.mxu0 0.0
        %1003 = vmatpush2.msra.mxu0 0.0
        %1004 = vmatprep.subr.mxu0 0.0
        %1005 = vmatpush2.msra.mxu0 0.0
        %1006 = vmatprep.subr.mxu0 0.0
        %1007 = vmatpush2.msra.mxu0 0.0
        %1008 = vmatprep.subr.mxu0 0.0
        %1009 = vmatpush2.msra.mxu0 0.0
        %1010 = vmatprep.subr.mxu0 0.0
        %1011 = vmatpush2.msra.mxu0 0.0
        %1012 = vmatprep.mubr.f32.mxu0 0.0
        %v1013 = vand.u32 %v399, 4294901760
        %1014 = vmatmul.mubr.f32.gmra.mxu0 %v1013
        %v1015 = vpop.f32.mrf.mxu0
        %v1016 = vadd.f32 %v897, %v1015
        %v1017 = vpop.f32.mrf.mxu0
        %1018 = vdwg.mxu0
        %1019 = vmatprep.subr.mxu0 0.0
        %v1020 = vand.u32 %v463, 4294901760
        %1021 = vmatpush1.msra.mxu0 %v1020
        %1022 = vmatprep.subr.mxu0 0.0
        %v1023 = vand.u32 %v462, 4294901760
        %1024 = vmatpush1.msra.mxu0 %v1023
        %1025 = vmatprep.subr.mxu0 0.0
        %v1026 = vand.u32 %v461, 4294901760
        %1027 = vmatpush1.msra.mxu0 %v1026
        %1028 = vmatprep.subr.mxu0 0.0
        %v1029 = vand.u32 %v460, 4294901760
        %1030 = vmatpush1.msra.mxu0 %v1029
        %1031 = vmatprep.subr.mxu0 0.0
        %v1032 = vand.u32 %v459, 4294901760
        %1033 = vmatpush1.msra.mxu0 %v1032
        %1034 = vmatprep.subr.mxu0 0.0
        %v1035 = vand.u32 %v458, 4294901760
        %1036 = vmatpush1.msra.mxu0 %v1035
        %1037 = vmatprep.subr.mxu0 0.0
        %v1038 = vand.u32 %v457, 4294901760
        %1039 = vmatpush1.msra.mxu0 %v1038
        %1040 = vmatprep.subr.mxu0 0.0
        %v1041 = vand.u32 %v456, 4294901760
        %1042 = vmatpush1.msra.mxu0 %v1041
        %1043 = vmatprep.subr.mxu0 0.0
        %v1044 = vand.u32 %v455, 4294901760
        %1045 = vmatpush1.msra.mxu0 %v1044
        %1046 = vmatprep.subr.mxu0 0.0
        %v1047 = vand.u32 %v454, 4294901760
        %1048 = vmatpush1.msra.mxu0 %v1047
        %1049 = vmatprep.subr.mxu0 0.0
        %v1050 = vand.u32 %v453, 4294901760
        %1051 = vmatpush1.msra.mxu0 %v1050
        %1052 = vmatprep.subr.mxu0 0.0
        %v1053 = vand.u32 %v452, 4294901760
        %1054 = vmatpush1.msra.mxu0 %v1053
        %1055 = vmatprep.subr.mxu0 0.0
        %v1056 = vand.u32 %v451, 4294901760
        %1057 = vmatpush1.msra.mxu0 %v1056
        %1058 = vmatprep.subr.mxu0 0.0
        %v1059 = vand.u32 %v450, 4294901760
        %1060 = vmatpush1.msra.mxu0 %v1059
        %1061 = vmatprep.subr.mxu0 0.0
        %v1062 = vand.u32 %v449, 4294901760
        %1063 = vmatpush1.msra.mxu0 %v1062
        %1064 = vmatprep.subr.mxu0 0.0
        %v1065 = vand.u32 %v448, 4294901760
        %1066 = vmatpush1.msra.mxu0 %v1065
        %1067 = vmatprep.subr.mxu0 0.0
        %1068 = vmatpush2.msra.mxu0 0.0
        %1069 = vmatprep.subr.mxu0 0.0
        %1070 = vmatpush2.msra.mxu0 0.0
        %1071 = vmatprep.subr.mxu0 0.0
        %1072 = vmatpush2.msra.mxu0 0.0
        %1073 = vmatprep.subr.mxu0 0.0
        %1074 = vmatpush2.msra.mxu0 0.0
        %1075 = vmatprep.subr.mxu0 0.0
        %1076 = vmatpush2.msra.mxu0 0.0
        %1077 = vmatprep.subr.mxu0 0.0
        %1078 = vmatpush2.msra.mxu0 0.0
        %1079 = vmatprep.subr.mxu0 0.0
        %1080 = vmatpush2.msra.mxu0 0.0
        %1081 = vmatprep.subr.mxu0 0.0
        %1082 = vmatpush2.msra.mxu0 0.0
        %1083 = vmatprep.subr.mxu0 0.0
        %1084 = vmatpush2.msra.mxu0 0.0
        %1085 = vmatprep.subr.mxu0 0.0
        %1086 = vmatpush2.msra.mxu0 0.0
        %1087 = vmatprep.subr.mxu0 0.0
        %1088 = vmatpush2.msra.mxu0 0.0
        %1089 = vmatprep.subr.mxu0 0.0
        %1090 = vmatpush2.msra.mxu0 0.0
        %1091 = vmatprep.subr.mxu0 0.0
        %1092 = vmatpush2.msra.mxu0 0.0
        %1093 = vmatprep.subr.mxu0 0.0
        %1094 = vmatpush2.msra.mxu0 0.0
        %1095 = vmatprep.subr.mxu0 0.0
        %1096 = vmatpush2.msra.mxu0 0.0
        %1097 = vmatprep.subr.mxu0 0.0
        %1098 = vmatpush2.msra.mxu0 0.0
        %1099 = vmatprep.mubr.f32.mxu0 0.0
        %v1100 = vand.u32 %v399, 4294901760
        %1101 = vmatmul.mubr.f32.gmra.mxu0 %v1100
        %v1102 = vpop.f32.mrf.mxu0
        %v1103 = vadd.f32 %v1016, %v1102
        %v1104 = vpop.f32.mrf.mxu0
        %1105 = vdwg.mxu0
        %v1106 = vadd.f32 %v464, %v1103
        %vm1107 = vcmask 256000
        %1108 = vst.msk [vmem:[#allocation2] sm:$0x7] %vm1107, %v1106
        %v1109 = vld [vmem:[#allocation3] sm:$0x7]
        %vm1110 = vcmask 1042432
        %v1111 = vsel %vm1110, %v399, 0.0
        %1112 = vadd.xlane.f32.xlu0 %v1111
        %v1113 = vpop.xlane.xlu0 %1112
        %v1114 = vadd.f32 %v1109, %v1113
        %vm1115 = vcmask 2048
        %1116 = vst.msk [vmem:[#allocation3] sm:$0x7] %vm1115, %v1114
        %p1117 = scmp.eq.s32.totalorder %s20, 1
        // Predicated region
        $region57: #{tpu_custom_call.1} parent=51 // pred_check
          %p1118 = pneg %p1117
        $region58: #{tpu_custom_call.1} parent=51 // pred_check_branch
          %1120 = sbr.rel (%p1118) target = $region60
        $region59: #{tpu_custom_call.1} parent=51 // pred_region
          %v1121 = vld [vmem:[#allocation2] sm:$0x7]
          %v1122 = vld [vmem:[#allocation3] sm:$0x7]
          %v1123 = vmax.f32 %v1122, 1.0
          %1125 = vset.pattern.permute.xlu0 0
          %1126 = vperm.xlu0 %1125, %v1123
          %v1127 = vpop.permute.xlu0 %1126
          %v1129 = vrcp.pop %v1127
          %v1130 = vmul.f32 %v1121, %v1129
          %v1131 = vld [vmem:[%s2] sm:$0xff]
          %v1132 = vld [vmem:[%s2 + $0x8] sm:$0xff]
          %v1133 = vld [vmem:[%s2 + $0x10] sm:$0xff]
          %v1134 = vld [vmem:[%s2 + $0x18] sm:$0xff]
          %v1135 = vld [vmem:[%s3] sm:$0x1]
          %v1137 = vlaneseq
          %v1138 = vshrl.u32 %v1137, 7
          %v1139 = vsub.s32 0, %v1138
          %v1140 = vrot.slane %v1135, %v1139
          %vm1142 = vcmask 261120
          %v1144 = vsel %vm1142, %v1130, 0
          %1146 = vmatprep.subr.mxu0 0.0
          %1147 = vmatpush1.msra.mxu0 0.0
          %1148 = vmatprep.subr.mxu0 0.0
          %1149 = vmatpush1.msra.mxu0 0.0
          %1150 = vmatprep.subr.mxu0 0.0
          %1151 = vmatpush1.msra.mxu0 0.0
          %1152 = vmatprep.subr.mxu0 0.0
          %1153 = vmatpush1.msra.mxu0 0.0
          %1154 = vmatprep.subr.mxu0 0.0
          %1155 = vmatpush1.msra.mxu0 0.0
          %1156 = vmatprep.subr.mxu0 0.0
          %1157 = vmatpush1.msra.mxu0 0.0
          %1158 = vmatprep.subr.mxu0 0.0
          %1159 = vmatpush1.msra.mxu0 0.0
          %1160 = vmatprep.subr.mxu0 0.0
          %1161 = vmatpush1.msra.mxu0 0.0
          %1162 = vmatprep.subr.mxu0 0.0
          %1163 = vmatpush1.msra.mxu0 0.0
          %1164 = vmatprep.subr.mxu0 0.0
          %1165 = vmatpush1.msra.mxu0 0.0
          %1166 = vmatprep.subr.mxu0 0.0
          %1167 = vmatpush1.msra.mxu0 0.0
          %1168 = vmatprep.subr.mxu0 0.0
          %1169 = vmatpush1.msra.mxu0 0.0
          %1170 = vmatprep.subr.mxu0 0.0
          %v1171 = vand.u32 %v1134, 4294901760
          %1172 = vmatpush1.msra.mxu0 %v1171
          %1173 = vmatprep.subr.mxu0 0.0
          %v1174 = vand.u32 %v1133, 4294901760
          %1175 = vmatpush1.msra.mxu0 %v1174
          %1176 = vmatprep.subr.mxu0 0.0
          %v1177 = vand.u32 %v1132, 4294901760
          %1178 = vmatpush1.msra.mxu0 %v1177
          %1179 = vmatprep.subr.mxu0 0.0
          %v1180 = vand.u32 %v1131, 4294901760
          %1181 = vmatpush1.msra.mxu0 %v1180
          %1182 = vmatprep.subr.mxu0 0.0
          %1183 = vmatpush2.msra.mxu0 0.0
          %1184 = vmatprep.subr.mxu0 0.0
          %1185 = vmatpush2.msra.mxu0 0.0
          %1186 = vmatprep.subr.mxu0 0.0
          %1187 = vmatpush2.msra.mxu0 0.0
          %1188 = vmatprep.subr.mxu0 0.0
          %1189 = vmatpush2.msra.mxu0 0.0
          %1190 = vmatprep.subr.mxu0 0.0
          %1191 = vmatpush2.msra.mxu0 0.0
          %1192 = vmatprep.subr.mxu0 0.0
          %1193 = vmatpush2.msra.mxu0 0.0
          %1194 = vmatprep.subr.mxu0 0.0
          %1195 = vmatpush2.msra.mxu0 0.0
          %1196 = vmatprep.subr.mxu0 0.0
          %1197 = vmatpush2.msra.mxu0 0.0
          %1198 = vmatprep.subr.mxu0 0.0
          %1199 = vmatpush2.msra.mxu0 0.0
          %1200 = vmatprep.subr.mxu0 0.0
          %1201 = vmatpush2.msra.mxu0 0.0
          %1202 = vmatprep.subr.mxu0 0.0
          %1203 = vmatpush2.msra.mxu0 0.0
          %1204 = vmatprep.subr.mxu0 0.0
          %1205 = vmatpush2.msra.mxu0 0.0
          %1206 = vmatprep.subr.mxu0 0.0
          %1207 = vmatpush2.msra.mxu0 0.0
          %1208 = vmatprep.subr.mxu0 0.0
          %1209 = vmatpush2.msra.mxu0 0.0
          %1210 = vmatprep.subr.mxu0 0.0
          %1211 = vmatpush2.msra.mxu0 0.0
          %1212 = vmatprep.subr.mxu0 0.0
          %1213 = vmatpush2.msra.mxu0 0.0
          %1214 = vmatprep.mubr.f32.mxu0 0.0
          %v1215 = vand.u32 %v1144, 4294901760
          %v1216 = vsub.f32 %v1144, %v1215
          %v1217 = vand.u32 %v1216, 4294901760
          %v1218 = vsub.f32 %v1216, %v1217
          %v1219 = vand.u32 %v1218, 4294901760
          %1220 = vmatmul.mubr.f32.gmra.mxu0 %v1219
          %v1221 = vpop.f32.mrf.mxu0
          %v1222 = vadd.f32 %v1140, %v1221
          %v1223 = vpop.f32.mrf.mxu0
          %1224 = vdwg.mxu0
          %1225 = vmatprep.subr.mxu0 0.0
          %1226 = vmatpush1.msra.mxu0 0.0
          %1227 = vmatprep.subr.mxu0 0.0
          %1228 = vmatpush1.msra.mxu0 0.0
          %1229 = vmatprep.subr.mxu0 0.0
          %1230 = vmatpush1.msra.mxu0 0.0
          %1231 = vmatprep.subr.mxu0 0.0
          %1232 = vmatpush1.msra.mxu0 0.0
          %1233 = vmatprep.subr.mxu0 0.0
          %1234 = vmatpush1.msra.mxu0 0.0
          %1235 = vmatprep.subr.mxu0 0.0
          %1236 = vmatpush1.msra.mxu0 0.0
          %1237 = vmatprep.subr.mxu0 0.0
          %1238 = vmatpush1.msra.mxu0 0.0
          %1239 = vmatprep.subr.mxu0 0.0
          %1240 = vmatpush1.msra.mxu0 0.0
          %1241 = vmatprep.subr.mxu0 0.0
          %1242 = vmatpush1.msra.mxu0 0.0
          %1243 = vmatprep.subr.mxu0 0.0
          %1244 = vmatpush1.msra.mxu0 0.0
          %1245 = vmatprep.subr.mxu0 0.0
          %1246 = vmatpush1.msra.mxu0 0.0
          %1247 = vmatprep.subr.mxu0 0.0
          %1248 = vmatpush1.msra.mxu0 0.0
          %1249 = vmatprep.subr.mxu0 0.0
          %v1250 = vand.u32 %v1134, 4294901760
          %v1251 = vsub.f32 %v1134, %v1250
          %v1252 = vand.u32 %v1251, 4294901760
          %v1253 = vsub.f32 %v1251, %v1252
          %v1254 = vand.u32 %v1253, 4294901760
          %1255 = vmatpush1.msra.mxu0 %v1254
          %1256 = vmatprep.subr.mxu0 0.0
          %v1257 = vand.u32 %v1133, 4294901760
          %v1258 = vsub.f32 %v1133, %v1257
          %v1259 = vand.u32 %v1258, 4294901760
          %v1260 = vsub.f32 %v1258, %v1259
          %v1261 = vand.u32 %v1260, 4294901760
          %1262 = vmatpush1.msra.mxu0 %v1261
          %1263 = vmatprep.subr.mxu0 0.0
          %v1264 = vand.u32 %v1132, 4294901760
          %v1265 = vsub.f32 %v1132, %v1264
          %v1266 = vand.u32 %v1265, 4294901760
          %v1267 = vsub.f32 %v1265, %v1266
          %v1268 = vand.u32 %v1267, 4294901760
          %1269 = vmatpush1.msra.mxu0 %v1268
          %1270 = vmatprep.subr.mxu0 0.0
          %v1271 = vand.u32 %v1131, 4294901760
          %v1272 = vsub.f32 %v1131, %v1271
          %v1273 = vand.u32 %v1272, 4294901760
          %v1274 = vsub.f32 %v1272, %v1273
          %v1275 = vand.u32 %v1274, 4294901760
          %1276 = vmatpush1.msra.mxu0 %v1275
          %1277 = vmatprep.subr.mxu0 0.0
          %1278 = vmatpush2.msra.mxu0 0.0
          %1279 = vmatprep.subr.mxu0 0.0
          %1280 = vmatpush2.msra.mxu0 0.0
          %1281 = vmatprep.subr.mxu0 0.0
          %1282 = vmatpush2.msra.mxu0 0.0
          %1283 = vmatprep.subr.mxu0 0.0
          %1284 = vmatpush2.msra.mxu0 0.0
          %1285 = vmatprep.subr.mxu0 0.0
          %1286 = vmatpush2.msra.mxu0 0.0
          %1287 = vmatprep.subr.mxu0 0.0
          %1288 = vmatpush2.msra.mxu0 0.0
          %1289 = vmatprep.subr.mxu0 0.0
          %1290 = vmatpush2.msra.mxu0 0.0
          %1291 = vmatprep.subr.mxu0 0.0
          %1292 = vmatpush2.msra.mxu0 0.0
          %1293 = vmatprep.subr.mxu0 0.0
          %1294 = vmatpush2.msra.mxu0 0.0
          %1295 = vmatprep.subr.mxu0 0.0
          %1296 = vmatpush2.msra.mxu0 0.0
          %1297 = vmatprep.subr.mxu0 0.0
          %1298 = vmatpush2.msra.mxu0 0.0
          %1299 = vmatprep.subr.mxu0 0.0
          %1300 = vmatpush2.msra.mxu0 0.0
          %1301 = vmatprep.subr.mxu0 0.0
          %1302 = vmatpush2.msra.mxu0 0.0
          %1303 = vmatprep.subr.mxu0 0.0
          %1304 = vmatpush2.msra.mxu0 0.0
          %1305 = vmatprep.subr.mxu0 0.0
          %1306 = vmatpush2.msra.mxu0 0.0
          %1307 = vmatprep.subr.mxu0 0.0
          %1308 = vmatpush2.msra.mxu0 0.0
          %1309 = vmatprep.mubr.f32.mxu0 0.0
          %v1310 = vand.u32 %v1144, 4294901760
          %1311 = vmatmul.mubr.f32.gmra.mxu0 %v1310
          %v1312 = vpop.f32.mrf.mxu0
          %v1313 = vadd.f32 %v1222, %v1312
          %v1314 = vpop.f32.mrf.mxu0
          %1315 = vdwg.mxu0
          %1316 = vmatprep.subr.mxu0 0.0
          %1317 = vmatpush1.msra.mxu0 0.0
          %1318 = vmatprep.subr.mxu0 0.0
          %1319 = vmatpush1.msra.mxu0 0.0
          %1320 = vmatprep.subr.mxu0 0.0
          %1321 = vmatpush1.msra.mxu0 0.0
          %1322 = vmatprep.subr.mxu0 0.0
          %1323 = vmatpush1.msra.mxu0 0.0
          %1324 = vmatprep.subr.mxu0 0.0
          %1325 = vmatpush1.msra.mxu0 0.0
          %1326 = vmatprep.subr.mxu0 0.0
          %1327 = vmatpush1.msra.mxu0 0.0
          %1328 = vmatprep.subr.mxu0 0.0
          %1329 = vmatpush1.msra.mxu0 0.0
          %1330 = vmatprep.subr.mxu0 0.0
          %1331 = vmatpush1.msra.mxu0 0.0
          %1332 = vmatprep.subr.mxu0 0.0
          %1333 = vmatpush1.msra.mxu0 0.0
          %1334 = vmatprep.subr.mxu0 0.0
          %1335 = vmatpush1.msra.mxu0 0.0
          %1336 = vmatprep.subr.mxu0 0.0
          %1337 = vmatpush1.msra.mxu0 0.0
          %1338 = vmatprep.subr.mxu0 0.0
          %1339 = vmatpush1.msra.mxu0 0.0
          %1340 = vmatprep.subr.mxu0 0.0
          %v1341 = vand.u32 %v1134, 4294901760
          %v1342 = vsub.f32 %v1134, %v1341
          %1343 = vmatpush1.msra.mxu0 %v1342
          %1344 = vmatprep.subr.mxu0 0.0
          %v1345 = vand.u32 %v1133, 4294901760
          %v1346 = vsub.f32 %v1133, %v1345
          %1347 = vmatpush1.msra.mxu0 %v1346
          %1348 = vmatprep.subr.mxu0 0.0
          %v1349 = vand.u32 %v1132, 4294901760
          %v1350 = vsub.f32 %v1132, %v1349
          %1351 = vmatpush1.msra.mxu0 %v1350
          %1352 = vmatprep.subr.mxu0 0.0
          %v1353 = vand.u32 %v1131, 4294901760
          %v1354 = vsub.f32 %v1131, %v1353
          %1355 = vmatpush1.msra.mxu0 %v1354
          %1356 = vmatprep.subr.mxu0 0.0
          %1357 = vmatpush2.msra.mxu0 0.0
          %1358 = vmatprep.subr.mxu0 0.0
          %1359 = vmatpush2.msra.mxu0 0.0
          %1360 = vmatprep.subr.mxu0 0.0
          %1361 = vmatpush2.msra.mxu0 0.0
          %1362 = vmatprep.subr.mxu0 0.0
          %1363 = vmatpush2.msra.mxu0 0.0
          %1364 = vmatprep.subr.mxu0 0.0
          %1365 = vmatpush2.msra.mxu0 0.0
          %1366 = vmatprep.subr.mxu0 0.0
          %1367 = vmatpush2.msra.mxu0 0.0
          %1368 = vmatprep.subr.mxu0 0.0
          %1369 = vmatpush2.msra.mxu0 0.0
          %1370 = vmatprep.subr.mxu0 0.0
          %1371 = vmatpush2.msra.mxu0 0.0
          %1372 = vmatprep.subr.mxu0 0.0
          %1373 = vmatpush2.msra.mxu0 0.0
          %1374 = vmatprep.subr.mxu0 0.0
          %1375 = vmatpush2.msra.mxu0 0.0
          %1376 = vmatprep.subr.mxu0 0.0
          %1377 = vmatpush2.msra.mxu0 0.0
          %1378 = vmatprep.subr.mxu0 0.0
          %1379 = vmatpush2.msra.mxu0 0.0
          %1380 = vmatprep.subr.mxu0 0.0
          %1381 = vmatpush2.msra.mxu0 0.0
          %1382 = vmatprep.subr.mxu0 0.0
          %1383 = vmatpush2.msra.mxu0 0.0
          %1384 = vmatprep.subr.mxu0 0.0
          %1385 = vmatpush2.msra.mxu0 0.0
          %1386 = vmatprep.subr.mxu0 0.0
          %1387 = vmatpush2.msra.mxu0 0.0
          %1388 = vmatprep.mubr.f32.mxu0 0.0
          %v1389 = vand.u32 %v1144, 4294901760
          %v1390 = vsub.f32 %v1144, %v1389
          %1391 = vmatmul.mubr.f32.gmra.mxu0 %v1390
          %v1392 = vpop.f32.mrf.mxu0
          %v1393 = vadd.f32 %v1313, %v1392
          %v1394 = vpop.f32.mrf.mxu0
          %1395 = vdwg.mxu0
          %1396 = vmatprep.subr.mxu0 0.0
          %1397 = vmatpush1.msra.mxu0 0.0
          %1398 = vmatprep.subr.mxu0 0.0
          %1399 = vmatpush1.msra.mxu0 0.0
          %1400 = vmatprep.subr.mxu0 0.0
          %1401 = vmatpush1.msra.mxu0 0.0
          %1402 = vmatprep.subr.mxu0 0.0
          %1403 = vmatpush1.msra.mxu0 0.0
          %1404 = vmatprep.subr.mxu0 0.0
          %1405 = vmatpush1.msra.mxu0 0.0
          %1406 = vmatprep.subr.mxu0 0.0
          %1407 = vmatpush1.msra.mxu0 0.0
          %1408 = vmatprep.subr.mxu0 0.0
          %1409 = vmatpush1.msra.mxu0 0.0
          %1410 = vmatprep.subr.mxu0 0.0
          %1411 = vmatpush1.msra.mxu0 0.0
          %1412 = vmatprep.subr.mxu0 0.0
          %1413 = vmatpush1.msra.mxu0 0.0
          %1414 = vmatprep.subr.mxu0 0.0
          %1415 = vmatpush1.msra.mxu0 0.0
          %1416 = vmatprep.subr.mxu0 0.0
          %1417 = vmatpush1.msra.mxu0 0.0
          %1418 = vmatprep.subr.mxu0 0.0
          %1419 = vmatpush1.msra.mxu0 0.0
          %1420 = vmatprep.subr.mxu0 0.0
          %v1421 = vand.u32 %v1134, 4294901760
          %1422 = vmatpush1.msra.mxu0 %v1421
          %1423 = vmatprep.subr.mxu0 0.0
          %v1424 = vand.u32 %v1133, 4294901760
          %1425 = vmatpush1.msra.mxu0 %v1424
          %1426 = vmatprep.subr.mxu0 0.0
          %v1427 = vand.u32 %v1132, 4294901760
          %1428 = vmatpush1.msra.mxu0 %v1427
          %1429 = vmatprep.subr.mxu0 0.0
          %v1430 = vand.u32 %v1131, 4294901760
          %1431 = vmatpush1.msra.mxu0 %v1430
          %1432 = vmatprep.subr.mxu0 0.0
          %1433 = vmatpush2.msra.mxu0 0.0
          %1434 = vmatprep.subr.mxu0 0.0
          %1435 = vmatpush2.msra.mxu0 0.0
          %1436 = vmatprep.subr.mxu0 0.0
          %1437 = vmatpush2.msra.mxu0 0.0
          %1438 = vmatprep.subr.mxu0 0.0
          %1439 = vmatpush2.msra.mxu0 0.0
          %1440 = vmatprep.subr.mxu0 0.0
          %1441 = vmatpush2.msra.mxu0 0.0
          %1442 = vmatprep.subr.mxu0 0.0
          %1443 = vmatpush2.msra.mxu0 0.0
          %1444 = vmatprep.subr.mxu0 0.0
          %1445 = vmatpush2.msra.mxu0 0.0
          %1446 = vmatprep.subr.mxu0 0.0
          %1447 = vmatpush2.msra.mxu0 0.0
          %1448 = vmatprep.subr.mxu0 0.0
          %1449 = vmatpush2.msra.mxu0 0.0
          %1450 = vmatprep.subr.mxu0 0.0
          %1451 = vmatpush2.msra.mxu0 0.0
          %1452 = vmatprep.subr.mxu0 0.0
          %1453 = vmatpush2.msra.mxu0 0.0
          %1454 = vmatprep.subr.mxu0 0.0
          %1455 = vmatpush2.msra.mxu0 0.0
          %1456 = vmatprep.subr.mxu0 0.0
          %1457 = vmatpush2.msra.mxu0 0.0
          %1458 = vmatprep.subr.mxu0 0.0
          %1459 = vmatpush2.msra.mxu0 0.0
          %1460 = vmatprep.subr.mxu0 0.0
          %1461 = vmatpush2.msra.mxu0 0.0
          %1462 = vmatprep.subr.mxu0 0.0
          %1463 = vmatpush2.msra.mxu0 0.0
          %1464 = vmatprep.mubr.f32.mxu0 0.0
          %v1465 = vand.u32 %v1144, 4294901760
          %v1466 = vsub.f32 %v1144, %v1465
          %v1467 = vand.u32 %v1466, 4294901760
          %1468 = vmatmul.mubr.f32.gmra.mxu0 %v1467
          %v1469 = vpop.f32.mrf.mxu0
          %v1470 = vadd.f32 %v1393, %v1469
          %v1471 = vpop.f32.mrf.mxu0
          %1472 = vdwg.mxu0
          %1473 = vmatprep.subr.mxu0 0.0
          %1474 = vmatpush1.msra.mxu0 0.0
          %1475 = vmatprep.subr.mxu0 0.0
          %1476 = vmatpush1.msra.mxu0 0.0
          %1477 = vmatprep.subr.mxu0 0.0
          %1478 = vmatpush1.msra.mxu0 0.0
          %1479 = vmatprep.subr.mxu0 0.0
          %1480 = vmatpush1.msra.mxu0 0.0
          %1481 = vmatprep.subr.mxu0 0.0
          %1482 = vmatpush1.msra.mxu0 0.0
          %1483 = vmatprep.subr.mxu0 0.0
          %1484 = vmatpush1.msra.mxu0 0.0
          %1485 = vmatprep.subr.mxu0 0.0
          %1486 = vmatpush1.msra.mxu0 0.0
          %1487 = vmatprep.subr.mxu0 0.0
          %1488 = vmatpush1.msra.mxu0 0.0
          %1489 = vmatprep.subr.mxu0 0.0
          %1490 = vmatpush1.msra.mxu0 0.0
          %1491 = vmatprep.subr.mxu0 0.0
          %1492 = vmatpush1.msra.mxu0 0.0
          %1493 = vmatprep.subr.mxu0 0.0
          %1494 = vmatpush1.msra.mxu0 0.0
          %1495 = vmatprep.subr.mxu0 0.0
          %1496 = vmatpush1.msra.mxu0 0.0
          %1497 = vmatprep.subr.mxu0 0.0
          %v1498 = vand.u32 %v1134, 4294901760
          %v1499 = vsub.f32 %v1134, %v1498
          %v1500 = vand.u32 %v1499, 4294901760
          %1501 = vmatpush1.msra.mxu0 %v1500
          %1502 = vmatprep.subr.mxu0 0.0
          %v1503 = vand.u32 %v1133, 4294901760
          %v1504 = vsub.f32 %v1133, %v1503
          %v1505 = vand.u32 %v1504, 4294901760
          %1506 = vmatpush1.msra.mxu0 %v1505
          %1507 = vmatprep.subr.mxu0 0.0
          %v1508 = vand.u32 %v1132, 4294901760
          %v1509 = vsub.f32 %v1132, %v1508
          %v1510 = vand.u32 %v1509, 4294901760
          %1511 = vmatpush1.msra.mxu0 %v1510
          %1512 = vmatprep.subr.mxu0 0.0
          %v1513 = vand.u32 %v1131, 4294901760
          %v1514 = vsub.f32 %v1131, %v1513
          %v1515 = vand.u32 %v1514, 4294901760
          %1516 = vmatpush1.msra.mxu0 %v1515
          %1517 = vmatprep.subr.mxu0 0.0
          %1518 = vmatpush2.msra.mxu0 0.0
          %1519 = vmatprep.subr.mxu0 0.0
          %1520 = vmatpush2.msra.mxu0 0.0
          %1521 = vmatprep.subr.mxu0 0.0
          %1522 = vmatpush2.msra.mxu0 0.0
          %1523 = vmatprep.subr.mxu0 0.0
          %1524 = vmatpush2.msra.mxu0 0.0
          %1525 = vmatprep.subr.mxu0 0.0
          %1526 = vmatpush2.msra.mxu0 0.0
          %1527 = vmatprep.subr.mxu0 0.0
          %1528 = vmatpush2.msra.mxu0 0.0
          %1529 = vmatprep.subr.mxu0 0.0
          %1530 = vmatpush2.msra.mxu0 0.0
          %1531 = vmatprep.subr.mxu0 0.0
          %1532 = vmatpush2.msra.mxu0 0.0
          %1533 = vmatprep.subr.mxu0 0.0
          %1534 = vmatpush2.msra.mxu0 0.0
          %1535 = vmatprep.subr.mxu0 0.0
          %1536 = vmatpush2.msra.mxu0 0.0
          %1537 = vmatprep.subr.mxu0 0.0
          %1538 = vmatpush2.msra.mxu0 0.0
          %1539 = vmatprep.subr.mxu0 0.0
          %1540 = vmatpush2.msra.mxu0 0.0
          %1541 = vmatprep.subr.mxu0 0.0
          %1542 = vmatpush2.msra.mxu0 0.0
          %1543 = vmatprep.subr.mxu0 0.0
          %1544 = vmatpush2.msra.mxu0 0.0
          %1545 = vmatprep.subr.mxu0 0.0
          %1546 = vmatpush2.msra.mxu0 0.0
          %1547 = vmatprep.subr.mxu0 0.0
          %1548 = vmatpush2.msra.mxu0 0.0
          %1549 = vmatprep.mubr.f32.mxu0 0.0
          %v1550 = vand.u32 %v1144, 4294901760
          %1551 = vmatmul.mubr.f32.gmra.mxu0 %v1550
          %v1552 = vpop.f32.mrf.mxu0
          %v1553 = vadd.f32 %v1470, %v1552
          %v1554 = vpop.f32.mrf.mxu0
          %1555 = vdwg.mxu0
          %1556 = vmatprep.subr.mxu0 0.0
          %1557 = vmatpush1.msra.mxu0 0.0
          %1558 = vmatprep.subr.mxu0 0.0
          %1559 = vmatpush1.msra.mxu0 0.0
          %1560 = vmatprep.subr.mxu0 0.0
          %1561 = vmatpush1.msra.mxu0 0.0
          %1562 = vmatprep.subr.mxu0 0.0
          %1563 = vmatpush1.msra.mxu0 0.0
          %1564 = vmatprep.subr.mxu0 0.0
          %1565 = vmatpush1.msra.mxu0 0.0
          %1566 = vmatprep.subr.mxu0 0.0
          %1567 = vmatpush1.msra.mxu0 0.0
          %1568 = vmatprep.subr.mxu0 0.0
          %1569 = vmatpush1.msra.mxu0 0.0
          %1570 = vmatprep.subr.mxu0 0.0
          %1571 = vmatpush1.msra.mxu0 0.0
          %1572 = vmatprep.subr.mxu0 0.0
          %1573 = vmatpush1.msra.mxu0 0.0
          %1574 = vmatprep.subr.mxu0 0.0
          %1575 = vmatpush1.msra.mxu0 0.0
          %1576 = vmatprep.subr.mxu0 0.0
          %1577 = vmatpush1.msra.mxu0 0.0
          %1578 = vmatprep.subr.mxu0 0.0
          %1579 = vmatpush1.msra.mxu0 0.0
          %1580 = vmatprep.subr.mxu0 0.0
          %v1581 = vand.u32 %v1134, 4294901760
          %1582 = vmatpush1.msra.mxu0 %v1581
          %1583 = vmatprep.subr.mxu0 0.0
          %v1584 = vand.u32 %v1133, 4294901760
          %1585 = vmatpush1.msra.mxu0 %v1584
          %1586 = vmatprep.subr.mxu0 0.0
          %v1587 = vand.u32 %v1132, 4294901760
          %1588 = vmatpush1.msra.mxu0 %v1587
          %1589 = vmatprep.subr.mxu0 0.0
          %v1590 = vand.u32 %v1131, 4294901760
          %1591 = vmatpush1.msra.mxu0 %v1590
          %1592 = vmatprep.subr.mxu0 0.0
          %1593 = vmatpush2.msra.mxu0 0.0
          %1594 = vmatprep.subr.mxu0 0.0
          %1595 = vmatpush2.msra.mxu0 0.0
          %1596 = vmatprep.subr.mxu0 0.0
          %1597 = vmatpush2.msra.mxu0 0.0
          %1598 = vmatprep.subr.mxu0 0.0
          %1599 = vmatpush2.msra.mxu0 0.0
          %1600 = vmatprep.subr.mxu0 0.0
          %1601 = vmatpush2.msra.mxu0 0.0
          %1602 = vmatprep.subr.mxu0 0.0
          %1603 = vmatpush2.msra.mxu0 0.0
          %1604 = vmatprep.subr.mxu0 0.0
          %1605 = vmatpush2.msra.mxu0 0.0
          %1606 = vmatprep.subr.mxu0 0.0
          %1607 = vmatpush2.msra.mxu0 0.0
          %1608 = vmatprep.subr.mxu0 0.0
          %1609 = vmatpush2.msra.mxu0 0.0
          %1610 = vmatprep.subr.mxu0 0.0
          %1611 = vmatpush2.msra.mxu0 0.0
          %1612 = vmatprep.subr.mxu0 0.0
          %1613 = vmatpush2.msra.mxu0 0.0
          %1614 = vmatprep.subr.mxu0 0.0
          %1615 = vmatpush2.msra.mxu0 0.0
          %1616 = vmatprep.subr.mxu0 0.0
          %1617 = vmatpush2.msra.mxu0 0.0
          %1618 = vmatprep.subr.mxu0 0.0
          %1619 = vmatpush2.msra.mxu0 0.0
          %1620 = vmatprep.subr.mxu0 0.0
          %1621 = vmatpush2.msra.mxu0 0.0
          %1622 = vmatprep.subr.mxu0 0.0
          %1623 = vmatpush2.msra.mxu0 0.0
          %1624 = vmatprep.mubr.f32.mxu0 0.0
          %v1625 = vand.u32 %v1144, 4294901760
          %1626 = vmatmul.mubr.f32.gmra.mxu0 %v1625
          %v1627 = vpop.f32.mrf.mxu0
          %v1628 = vadd.f32 %v1553, %v1627
          %v1629 = vpop.f32.mrf.mxu0
          %1630 = vdwg.mxu0
          %v1631 = vmax.f32 %v1628, 0.0
          %v1632 = vld [vmem:[%s4] sm:$0xff]
          %v1633 = vld [vmem:[%s4 + $0x8] sm:$0xff]
          %v1634 = vld [vmem:[%s4 + $0x10] sm:$0xff]
          %v1635 = vld [vmem:[%s4 + $0x18] sm:$0xff]
          %v1636 = vld [vmem:[%s5] sm:$0x1]
          %v1638 = vlaneseq
          %v1639 = vshrl.u32 %v1638, 7
          %v1640 = vsub.s32 0, %v1639
          %v1641 = vrot.slane %v1636, %v1640
          %v1644 = vsel %vm1142, %v1631, 0
          %1646 = vmatprep.subr.mxu0 0.0
          %1647 = vmatpush1.msra.mxu0 0.0
          %1648 = vmatprep.subr.mxu0 0.0
          %1649 = vmatpush1.msra.mxu0 0.0
          %1650 = vmatprep.subr.mxu0 0.0
          %1651 = vmatpush1.msra.mxu0 0.0
          %1652 = vmatprep.subr.mxu0 0.0
          %1653 = vmatpush1.msra.mxu0 0.0
          %1654 = vmatprep.subr.mxu0 0.0
          %1655 = vmatpush1.msra.mxu0 0.0
          %1656 = vmatprep.subr.mxu0 0.0
          %1657 = vmatpush1.msra.mxu0 0.0
          %1658 = vmatprep.subr.mxu0 0.0
          %1659 = vmatpush1.msra.mxu0 0.0
          %1660 = vmatprep.subr.mxu0 0.0
          %1661 = vmatpush1.msra.mxu0 0.0
          %1662 = vmatprep.subr.mxu0 0.0
          %1663 = vmatpush1.msra.mxu0 0.0
          %1664 = vmatprep.subr.mxu0 0.0
          %1665 = vmatpush1.msra.mxu0 0.0
          %1666 = vmatprep.subr.mxu0 0.0
          %1667 = vmatpush1.msra.mxu0 0.0
          %1668 = vmatprep.subr.mxu0 0.0
          %1669 = vmatpush1.msra.mxu0 0.0
          %1670 = vmatprep.subr.mxu0 0.0
          %v1671 = vand.u32 %v1635, 4294901760
          %1672 = vmatpush1.msra.mxu0 %v1671
          %1673 = vmatprep.subr.mxu0 0.0
          %v1674 = vand.u32 %v1634, 4294901760
          %1675 = vmatpush1.msra.mxu0 %v1674
          %1676 = vmatprep.subr.mxu0 0.0
          %v1677 = vand.u32 %v1633, 4294901760
          %1678 = vmatpush1.msra.mxu0 %v1677
          %1679 = vmatprep.subr.mxu0 0.0
          %v1680 = vand.u32 %v1632, 4294901760
          %1681 = vmatpush1.msra.mxu0 %v1680
          %1682 = vmatprep.subr.mxu0 0.0
          %1683 = vmatpush2.msra.mxu0 0.0
          %1684 = vmatprep.subr.mxu0 0.0
          %1685 = vmatpush2.msra.mxu0 0.0
          %1686 = vmatprep.subr.mxu0 0.0
          %1687 = vmatpush2.msra.mxu0 0.0
          %1688 = vmatprep.subr.mxu0 0.0
          %1689 = vmatpush2.msra.mxu0 0.0
          %1690 = vmatprep.subr.mxu0 0.0
          %1691 = vmatpush2.msra.mxu0 0.0
          %1692 = vmatprep.subr.mxu0 0.0
          %1693 = vmatpush2.msra.mxu0 0.0
          %1694 = vmatprep.subr.mxu0 0.0
          %1695 = vmatpush2.msra.mxu0 0.0
          %1696 = vmatprep.subr.mxu0 0.0
          %1697 = vmatpush2.msra.mxu0 0.0
          %1698 = vmatprep.subr.mxu0 0.0
          %1699 = vmatpush2.msra.mxu0 0.0
          %1700 = vmatprep.subr.mxu0 0.0
          %1701 = vmatpush2.msra.mxu0 0.0
          %1702 = vmatprep.subr.mxu0 0.0
          %1703 = vmatpush2.msra.mxu0 0.0
          %1704 = vmatprep.subr.mxu0 0.0
          %1705 = vmatpush2.msra.mxu0 0.0
          %1706 = vmatprep.subr.mxu0 0.0
          %1707 = vmatpush2.msra.mxu0 0.0
          %1708 = vmatprep.subr.mxu0 0.0
          %1709 = vmatpush2.msra.mxu0 0.0
          %1710 = vmatprep.subr.mxu0 0.0
          %1711 = vmatpush2.msra.mxu0 0.0
          %1712 = vmatprep.subr.mxu0 0.0
          %1713 = vmatpush2.msra.mxu0 0.0
          %1714 = vmatprep.mubr.f32.mxu0 0.0
          %v1715 = vand.u32 %v1644, 4294901760
          %v1716 = vsub.f32 %v1644, %v1715
          %v1717 = vand.u32 %v1716, 4294901760
          %v1718 = vsub.f32 %v1716, %v1717
          %v1719 = vand.u32 %v1718, 4294901760
          %1720 = vmatmul.mubr.f32.gmra.mxu0 %v1719
          %v1721 = vpop.f32.mrf.mxu0
          %v1722 = vadd.f32 %v1641, %v1721
          %v1723 = vpop.f32.mrf.mxu0
          %1724 = vdwg.mxu0
          %1725 = vmatprep.subr.mxu0 0.0
          %1726 = vmatpush1.msra.mxu0 0.0
          %1727 = vmatprep.subr.mxu0 0.0
          %1728 = vmatpush1.msra.mxu0 0.0
          %1729 = vmatprep.subr.mxu0 0.0
          %1730 = vmatpush1.msra.mxu0 0.0
          %1731 = vmatprep.subr.mxu0 0.0
          %1732 = vmatpush1.msra.mxu0 0.0
          %1733 = vmatprep.subr.mxu0 0.0
          %1734 = vmatpush1.msra.mxu0 0.0
          %1735 = vmatprep.subr.mxu0 0.0
          %1736 = vmatpush1.msra.mxu0 0.0
          %1737 = vmatprep.subr.mxu0 0.0
          %1738 = vmatpush1.msra.mxu0 0.0
          %1739 = vmatprep.subr.mxu0 0.0
          %1740 = vmatpush1.msra.mxu0 0.0
          %1741 = vmatprep.subr.mxu0 0.0
          %1742 = vmatpush1.msra.mxu0 0.0
          %1743 = vmatprep.subr.mxu0 0.0
          %1744 = vmatpush1.msra.mxu0 0.0
          %1745 = vmatprep.subr.mxu0 0.0
          %1746 = vmatpush1.msra.mxu0 0.0
          %1747 = vmatprep.subr.mxu0 0.0
          %1748 = vmatpush1.msra.mxu0 0.0
          %1749 = vmatprep.subr.mxu0 0.0
          %v1750 = vand.u32 %v1635, 4294901760
          %v1751 = vsub.f32 %v1635, %v1750
          %v1752 = vand.u32 %v1751, 4294901760
          %v1753 = vsub.f32 %v1751, %v1752
          %v1754 = vand.u32 %v1753, 4294901760
          %1755 = vmatpush1.msra.mxu0 %v1754
          %1756 = vmatprep.subr.mxu0 0.0
          %v1757 = vand.u32 %v1634, 4294901760
          %v1758 = vsub.f32 %v1634, %v1757
          %v1759 = vand.u32 %v1758, 4294901760
          %v1760 = vsub.f32 %v1758, %v1759
          %v1761 = vand.u32 %v1760, 4294901760
          %1762 = vmatpush1.msra.mxu0 %v1761
          %1763 = vmatprep.subr.mxu0 0.0
          %v1764 = vand.u32 %v1633, 4294901760
          %v1765 = vsub.f32 %v1633, %v1764
          %v1766 = vand.u32 %v1765, 4294901760
          %v1767 = vsub.f32 %v1765, %v1766
          %v1768 = vand.u32 %v1767, 4294901760
          %1769 = vmatpush1.msra.mxu0 %v1768
          %1770 = vmatprep.subr.mxu0 0.0
          %v1771 = vand.u32 %v1632, 4294901760
          %v1772 = vsub.f32 %v1632, %v1771
          %v1773 = vand.u32 %v1772, 4294901760
          %v1774 = vsub.f32 %v1772, %v1773
          %v1775 = vand.u32 %v1774, 4294901760
          %1776 = vmatpush1.msra.mxu0 %v1775
          %1777 = vmatprep.subr.mxu0 0.0
          %1778 = vmatpush2.msra.mxu0 0.0
          %1779 = vmatprep.subr.mxu0 0.0
          %1780 = vmatpush2.msra.mxu0 0.0
          %1781 = vmatprep.subr.mxu0 0.0
          %1782 = vmatpush2.msra.mxu0 0.0
          %1783 = vmatprep.subr.mxu0 0.0
          %1784 = vmatpush2.msra.mxu0 0.0
          %1785 = vmatprep.subr.mxu0 0.0
          %1786 = vmatpush2.msra.mxu0 0.0
          %1787 = vmatprep.subr.mxu0 0.0
          %1788 = vmatpush2.msra.mxu0 0.0
          %1789 = vmatprep.subr.mxu0 0.0
          %1790 = vmatpush2.msra.mxu0 0.0
          %1791 = vmatprep.subr.mxu0 0.0
          %1792 = vmatpush2.msra.mxu0 0.0
          %1793 = vmatprep.subr.mxu0 0.0
          %1794 = vmatpush2.msra.mxu0 0.0
          %1795 = vmatprep.subr.mxu0 0.0
          %1796 = vmatpush2.msra.mxu0 0.0
          %1797 = vmatprep.subr.mxu0 0.0
          %1798 = vmatpush2.msra.mxu0 0.0
          %1799 = vmatprep.subr.mxu0 0.0
          %1800 = vmatpush2.msra.mxu0 0.0
          %1801 = vmatprep.subr.mxu0 0.0
          %1802 = vmatpush2.msra.mxu0 0.0
          %1803 = vmatprep.subr.mxu0 0.0
          %1804 = vmatpush2.msra.mxu0 0.0
          %1805 = vmatprep.subr.mxu0 0.0
          %1806 = vmatpush2.msra.mxu0 0.0
          %1807 = vmatprep.subr.mxu0 0.0
          %1808 = vmatpush2.msra.mxu0 0.0
          %1809 = vmatprep.mubr.f32.mxu0 0.0
          %v1810 = vand.u32 %v1644, 4294901760
          %1811 = vmatmul.mubr.f32.gmra.mxu0 %v1810
          %v1812 = vpop.f32.mrf.mxu0
          %v1813 = vadd.f32 %v1722, %v1812
          %v1814 = vpop.f32.mrf.mxu0
          %1815 = vdwg.mxu0
          %1816 = vmatprep.subr.mxu0 0.0
          %1817 = vmatpush1.msra.mxu0 0.0
          %1818 = vmatprep.subr.mxu0 0.0
          %1819 = vmatpush1.msra.mxu0 0.0
          %1820 = vmatprep.subr.mxu0 0.0
          %1821 = vmatpush1.msra.mxu0 0.0
          %1822 = vmatprep.subr.mxu0 0.0
          %1823 = vmatpush1.msra.mxu0 0.0
          %1824 = vmatprep.subr.mxu0 0.0
          %1825 = vmatpush1.msra.mxu0 0.0
          %1826 = vmatprep.subr.mxu0 0.0
          %1827 = vmatpush1.msra.mxu0 0.0
          %1828 = vmatprep.subr.mxu0 0.0
          %1829 = vmatpush1.msra.mxu0 0.0
          %1830 = vmatprep.subr.mxu0 0.0
          %1831 = vmatpush1.msra.mxu0 0.0
          %1832 = vmatprep.subr.mxu0 0.0
          %1833 = vmatpush1.msra.mxu0 0.0
          %1834 = vmatprep.subr.mxu0 0.0
          %1835 = vmatpush1.msra.mxu0 0.0
          %1836 = vmatprep.subr.mxu0 0.0
          %1837 = vmatpush1.msra.mxu0 0.0
          %1838 = vmatprep.subr.mxu0 0.0
          %1839 = vmatpush1.msra.mxu0 0.0
          %1840 = vmatprep.subr.mxu0 0.0
          %v1841 = vand.u32 %v1635, 4294901760
          %v1842 = vsub.f32 %v1635, %v1841
          %1843 = vmatpush1.msra.mxu0 %v1842
          %1844 = vmatprep.subr.mxu0 0.0
          %v1845 = vand.u32 %v1634, 4294901760
          %v1846 = vsub.f32 %v1634, %v1845
          %1847 = vmatpush1.msra.mxu0 %v1846
          %1848 = vmatprep.subr.mxu0 0.0
          %v1849 = vand.u32 %v1633, 4294901760
          %v1850 = vsub.f32 %v1633, %v1849
          %1851 = vmatpush1.msra.mxu0 %v1850
          %1852 = vmatprep.subr.mxu0 0.0
          %v1853 = vand.u32 %v1632, 4294901760
          %v1854 = vsub.f32 %v1632, %v1853
          %1855 = vmatpush1.msra.mxu0 %v1854
          %1856 = vmatprep.subr.mxu0 0.0
          %1857 = vmatpush2.msra.mxu0 0.0
          %1858 = vmatprep.subr.mxu0 0.0
          %1859 = vmatpush2.msra.mxu0 0.0
          %1860 = vmatprep.subr.mxu0 0.0
          %1861 = vmatpush2.msra.mxu0 0.0
          %1862 = vmatprep.subr.mxu0 0.0
          %1863 = vmatpush2.msra.mxu0 0.0
          %1864 = vmatprep.subr.mxu0 0.0
          %1865 = vmatpush2.msra.mxu0 0.0
          %1866 = vmatprep.subr.mxu0 0.0
          %1867 = vmatpush2.msra.mxu0 0.0
          %1868 = vmatprep.subr.mxu0 0.0
          %1869 = vmatpush2.msra.mxu0 0.0
          %1870 = vmatprep.subr.mxu0 0.0
          %1871 = vmatpush2.msra.mxu0 0.0
          %1872 = vmatprep.subr.mxu0 0.0
          %1873 = vmatpush2.msra.mxu0 0.0
          %1874 = vmatprep.subr.mxu0 0.0
          %1875 = vmatpush2.msra.mxu0 0.0
          %1876 = vmatprep.subr.mxu0 0.0
          %1877 = vmatpush2.msra.mxu0 0.0
          %1878 = vmatprep.subr.mxu0 0.0
          %1879 = vmatpush2.msra.mxu0 0.0
          %1880 = vmatprep.subr.mxu0 0.0
          %1881 = vmatpush2.msra.mxu0 0.0
          %1882 = vmatprep.subr.mxu0 0.0
          %1883 = vmatpush2.msra.mxu0 0.0
          %1884 = vmatprep.subr.mxu0 0.0
          %1885 = vmatpush2.msra.mxu0 0.0
          %1886 = vmatprep.subr.mxu0 0.0
          %1887 = vmatpush2.msra.mxu0 0.0
          %1888 = vmatprep.mubr.f32.mxu0 0.0
          %v1889 = vand.u32 %v1644, 4294901760
          %v1890 = vsub.f32 %v1644, %v1889
          %1891 = vmatmul.mubr.f32.gmra.mxu0 %v1890
          %v1892 = vpop.f32.mrf.mxu0
          %v1893 = vadd.f32 %v1813, %v1892
          %v1894 = vpop.f32.mrf.mxu0
          %1895 = vdwg.mxu0
          %1896 = vmatprep.subr.mxu0 0.0
          %1897 = vmatpush1.msra.mxu0 0.0
          %1898 = vmatprep.subr.mxu0 0.0
          %1899 = vmatpush1.msra.mxu0 0.0
          %1900 = vmatprep.subr.mxu0 0.0
          %1901 = vmatpush1.msra.mxu0 0.0
          %1902 = vmatprep.subr.mxu0 0.0
          %1903 = vmatpush1.msra.mxu0 0.0
          %1904 = vmatprep.subr.mxu0 0.0
          %1905 = vmatpush1.msra.mxu0 0.0
          %1906 = vmatprep.subr.mxu0 0.0
          %1907 = vmatpush1.msra.mxu0 0.0
          %1908 = vmatprep.subr.mxu0 0.0
          %1909 = vmatpush1.msra.mxu0 0.0
          %1910 = vmatprep.subr.mxu0 0.0
          %1911 = vmatpush1.msra.mxu0 0.0
          %1912 = vmatprep.subr.mxu0 0.0
          %1913 = vmatpush1.msra.mxu0 0.0
          %1914 = vmatprep.subr.mxu0 0.0
          %1915 = vmatpush1.msra.mxu0 0.0
          %1916 = vmatprep.subr.mxu0 0.0
          %1917 = vmatpush1.msra.mxu0 0.0
          %1918 = vmatprep.subr.mxu0 0.0
          %1919 = vmatpush1.msra.mxu0 0.0
          %1920 = vmatprep.subr.mxu0 0.0
          %v1921 = vand.u32 %v1635, 4294901760
          %1922 = vmatpush1.msra.mxu0 %v1921
          %1923 = vmatprep.subr.mxu0 0.0
          %v1924 = vand.u32 %v1634, 4294901760
          %1925 = vmatpush1.msra.mxu0 %v1924
          %1926 = vmatprep.subr.mxu0 0.0
          %v1927 = vand.u32 %v1633, 4294901760
          %1928 = vmatpush1.msra.mxu0 %v1927
          %1929 = vmatprep.subr.mxu0 0.0
          %v1930 = vand.u32 %v1632, 4294901760
          %1931 = vmatpush1.msra.mxu0 %v1930
          %1932 = vmatprep.subr.mxu0 0.0
          %1933 = vmatpush2.msra.mxu0 0.0
          %1934 = vmatprep.subr.mxu0 0.0
          %1935 = vmatpush2.msra.mxu0 0.0
          %1936 = vmatprep.subr.mxu0 0.0
          %1937 = vmatpush2.msra.mxu0 0.0
          %1938 = vmatprep.subr.mxu0 0.0
          %1939 = vmatpush2.msra.mxu0 0.0
          %1940 = vmatprep.subr.mxu0 0.0
          %1941 = vmatpush2.msra.mxu0 0.0
          %1942 = vmatprep.subr.mxu0 0.0
          %1943 = vmatpush2.msra.mxu0 0.0
          %1944 = vmatprep.subr.mxu0 0.0
          %1945 = vmatpush2.msra.mxu0 0.0
          %1946 = vmatprep.subr.mxu0 0.0
          %1947 = vmatpush2.msra.mxu0 0.0
          %1948 = vmatprep.subr.mxu0 0.0
          %1949 = vmatpush2.msra.mxu0 0.0
          %1950 = vmatprep.subr.mxu0 0.0
          %1951 = vmatpush2.msra.mxu0 0.0
          %1952 = vmatprep.subr.mxu0 0.0
          %1953 = vmatpush2.msra.mxu0 0.0
          %1954 = vmatprep.subr.mxu0 0.0
          %1955 = vmatpush2.msra.mxu0 0.0
          %1956 = vmatprep.subr.mxu0 0.0
          %1957 = vmatpush2.msra.mxu0 0.0
          %1958 = vmatprep.subr.mxu0 0.0
          %1959 = vmatpush2.msra.mxu0 0.0
          %1960 = vmatprep.subr.mxu0 0.0
          %1961 = vmatpush2.msra.mxu0 0.0
          %1962 = vmatprep.subr.mxu0 0.0
          %1963 = vmatpush2.msra.mxu0 0.0
          %1964 = vmatprep.mubr.f32.mxu0 0.0
          %v1965 = vand.u32 %v1644, 4294901760
          %v1966 = vsub.f32 %v1644, %v1965
          %v1967 = vand.u32 %v1966, 4294901760
          %1968 = vmatmul.mubr.f32.gmra.mxu0 %v1967
          %v1969 = vpop.f32.mrf.mxu0
          %v1970 = vadd.f32 %v1893, %v1969
          %v1971 = vpop.f32.mrf.mxu0
          %1972 = vdwg.mxu0
          %1973 = vmatprep.subr.mxu0 0.0
          %1974 = vmatpush1.msra.mxu0 0.0
          %1975 = vmatprep.subr.mxu0 0.0
          %1976 = vmatpush1.msra.mxu0 0.0
          %1977 = vmatprep.subr.mxu0 0.0
          %1978 = vmatpush1.msra.mxu0 0.0
          %1979 = vmatprep.subr.mxu0 0.0
          %1980 = vmatpush1.msra.mxu0 0.0
          %1981 = vmatprep.subr.mxu0 0.0
          %1982 = vmatpush1.msra.mxu0 0.0
          %1983 = vmatprep.subr.mxu0 0.0
          %1984 = vmatpush1.msra.mxu0 0.0
          %1985 = vmatprep.subr.mxu0 0.0
          %1986 = vmatpush1.msra.mxu0 0.0
          %1987 = vmatprep.subr.mxu0 0.0
          %1988 = vmatpush1.msra.mxu0 0.0
          %1989 = vmatprep.subr.mxu0 0.0
          %1990 = vmatpush1.msra.mxu0 0.0
          %1991 = vmatprep.subr.mxu0 0.0
          %1992 = vmatpush1.msra.mxu0 0.0
          %1993 = vmatprep.subr.mxu0 0.0
          %1994 = vmatpush1.msra.mxu0 0.0
          %1995 = vmatprep.subr.mxu0 0.0
          %1996 = vmatpush1.msra.mxu0 0.0
          %1997 = vmatprep.subr.mxu0 0.0
          %v1998 = vand.u32 %v1635, 4294901760
          %v1999 = vsub.f32 %v1635, %v1998
          %v2000 = vand.u32 %v1999, 4294901760
          %2001 = vmatpush1.msra.mxu0 %v2000
          %2002 = vmatprep.subr.mxu0 0.0
          %v2003 = vand.u32 %v1634, 4294901760
          %v2004 = vsub.f32 %v1634, %v2003
          %v2005 = vand.u32 %v2004, 4294901760
          %2006 = vmatpush1.msra.mxu0 %v2005
          %2007 = vmatprep.subr.mxu0 0.0
          %v2008 = vand.u32 %v1633, 4294901760
          %v2009 = vsub.f32 %v1633, %v2008
          %v2010 = vand.u32 %v2009, 4294901760
          %2011 = vmatpush1.msra.mxu0 %v2010
          %2012 = vmatprep.subr.mxu0 0.0
          %v2013 = vand.u32 %v1632, 4294901760
          %v2014 = vsub.f32 %v1632, %v2013
          %v2015 = vand.u32 %v2014, 4294901760
          %2016 = vmatpush1.msra.mxu0 %v2015
          %2017 = vmatprep.subr.mxu0 0.0
          %2018 = vmatpush2.msra.mxu0 0.0
          %2019 = vmatprep.subr.mxu0 0.0
          %2020 = vmatpush2.msra.mxu0 0.0
          %2021 = vmatprep.subr.mxu0 0.0
          %2022 = vmatpush2.msra.mxu0 0.0
          %2023 = vmatprep.subr.mxu0 0.0
          %2024 = vmatpush2.msra.mxu0 0.0
          %2025 = vmatprep.subr.mxu0 0.0
          %2026 = vmatpush2.msra.mxu0 0.0
          %2027 = vmatprep.subr.mxu0 0.0
          %2028 = vmatpush2.msra.mxu0 0.0
          %2029 = vmatprep.subr.mxu0 0.0
          %2030 = vmatpush2.msra.mxu0 0.0
          %2031 = vmatprep.subr.mxu0 0.0
          %2032 = vmatpush2.msra.mxu0 0.0
          %2033 = vmatprep.subr.mxu0 0.0
          %2034 = vmatpush2.msra.mxu0 0.0
          %2035 = vmatprep.subr.mxu0 0.0
          %2036 = vmatpush2.msra.mxu0 0.0
          %2037 = vmatprep.subr.mxu0 0.0
          %2038 = vmatpush2.msra.mxu0 0.0
          %2039 = vmatprep.subr.mxu0 0.0
          %2040 = vmatpush2.msra.mxu0 0.0
          %2041 = vmatprep.subr.mxu0 0.0
          %2042 = vmatpush2.msra.mxu0 0.0
          %2043 = vmatprep.subr.mxu0 0.0
          %2044 = vmatpush2.msra.mxu0 0.0
          %2045 = vmatprep.subr.mxu0 0.0
          %2046 = vmatpush2.msra.mxu0 0.0
          %2047 = vmatprep.subr.mxu0 0.0
          %2048 = vmatpush2.msra.mxu0 0.0
          %2049 = vmatprep.mubr.f32.mxu0 0.0
          %v2050 = vand.u32 %v1644, 4294901760
          %2051 = vmatmul.mubr.f32.gmra.mxu0 %v2050
          %v2052 = vpop.f32.mrf.mxu0
          %v2053 = vadd.f32 %v1970, %v2052
          %v2054 = vpop.f32.mrf.mxu0
          %2055 = vdwg.mxu0
          %2056 = vmatprep.subr.mxu0 0.0
          %2057 = vmatpush1.msra.mxu0 0.0
          %2058 = vmatprep.subr.mxu0 0.0
          %2059 = vmatpush1.msra.mxu0 0.0
          %2060 = vmatprep.subr.mxu0 0.0
          %2061 = vmatpush1.msra.mxu0 0.0
          %2062 = vmatprep.subr.mxu0 0.0
          %2063 = vmatpush1.msra.mxu0 0.0
          %2064 = vmatprep.subr.mxu0 0.0
          %2065 = vmatpush1.msra.mxu0 0.0
          %2066 = vmatprep.subr.mxu0 0.0
          %2067 = vmatpush1.msra.mxu0 0.0
          %2068 = vmatprep.subr.mxu0 0.0
          %2069 = vmatpush1.msra.mxu0 0.0
          %2070 = vmatprep.subr.mxu0 0.0
          %2071 = vmatpush1.msra.mxu0 0.0
          %2072 = vmatprep.subr.mxu0 0.0
          %2073 = vmatpush1.msra.mxu0 0.0
          %2074 = vmatprep.subr.mxu0 0.0
          %2075 = vmatpush1.msra.mxu0 0.0
          %2076 = vmatprep.subr.mxu0 0.0
          %2077 = vmatpush1.msra.mxu0 0.0
          %2078 = vmatprep.subr.mxu0 0.0
          %2079 = vmatpush1.msra.mxu0 0.0
          %2080 = vmatprep.subr.mxu0 0.0
          %v2081 = vand.u32 %v1635, 4294901760
          %2082 = vmatpush1.msra.mxu0 %v2081
          %2083 = vmatprep.subr.mxu0 0.0
          %v2084 = vand.u32 %v1634, 4294901760
          %2085 = vmatpush1.msra.mxu0 %v2084
          %2086 = vmatprep.subr.mxu0 0.0
          %v2087 = vand.u32 %v1633, 4294901760
          %2088 = vmatpush1.msra.mxu0 %v2087
          %2089 = vmatprep.subr.mxu0 0.0
          %v2090 = vand.u32 %v1632, 4294901760
          %2091 = vmatpush1.msra.mxu0 %v2090
          %2092 = vmatprep.subr.mxu0 0.0
          %2093 = vmatpush2.msra.mxu0 0.0
          %2094 = vmatprep.subr.mxu0 0.0
          %2095 = vmatpush2.msra.mxu0 0.0
          %2096 = vmatprep.subr.mxu0 0.0
          %2097 = vmatpush2.msra.mxu0 0.0
          %2098 = vmatprep.subr.mxu0 0.0
          %2099 = vmatpush2.msra.mxu0 0.0
          %2100 = vmatprep.subr.mxu0 0.0
          %2101 = vmatpush2.msra.mxu0 0.0
          %2102 = vmatprep.subr.mxu0 0.0
          %2103 = vmatpush2.msra.mxu0 0.0
          %2104 = vmatprep.subr.mxu0 0.0
          %2105 = vmatpush2.msra.mxu0 0.0
          %2106 = vmatprep.subr.mxu0 0.0
          %2107 = vmatpush2.msra.mxu0 0.0
          %2108 = vmatprep.subr.mxu0 0.0
          %2109 = vmatpush2.msra.mxu0 0.0
          %2110 = vmatprep.subr.mxu0 0.0
          %2111 = vmatpush2.msra.mxu0 0.0
          %2112 = vmatprep.subr.mxu0 0.0
          %2113 = vmatpush2.msra.mxu0 0.0
          %2114 = vmatprep.subr.mxu0 0.0
          %2115 = vmatpush2.msra.mxu0 0.0
          %2116 = vmatprep.subr.mxu0 0.0
          %2117 = vmatpush2.msra.mxu0 0.0
          %2118 = vmatprep.subr.mxu0 0.0
          %2119 = vmatpush2.msra.mxu0 0.0
          %2120 = vmatprep.subr.mxu0 0.0
          %2121 = vmatpush2.msra.mxu0 0.0
          %2122 = vmatprep.subr.mxu0 0.0
          %2123 = vmatpush2.msra.mxu0 0.0
          %2124 = vmatprep.mubr.f32.mxu0 0.0
          %v2125 = vand.u32 %v1644, 4294901760
          %2126 = vmatmul.mubr.f32.gmra.mxu0 %v2125
          %v2127 = vpop.f32.mrf.mxu0
          %v2128 = vadd.f32 %v2053, %v2127
          %v2129 = vpop.f32.mrf.mxu0
          %2130 = vdwg.mxu0
          %v2131 = vmax.f32 %v2128, 0.0
          %v2132 = vld [vmem:[%s6] sm:$0xff]
          %v2133 = vld [vmem:[%s6 + $0x8] sm:$0xff]
          %v2134 = vld [vmem:[%s6 + $0x10] sm:$0xff]
          %v2135 = vld [vmem:[%s6 + $0x18] sm:$0xff]
          %v2136 = vld [vmem:[%s7] sm:$0x1]
          %v2138 = vlaneseq
          %v2139 = vshrl.u32 %v2138, 7
          %v2140 = vsub.s32 0, %v2139
          %v2141 = vrot.slane %v2136, %v2140
          %v2144 = vsel %vm1142, %v2131, 0
          %2146 = vmatprep.subr.mxu0 0.0
          %2147 = vmatpush1.msra.mxu0 0.0
          %2148 = vmatprep.subr.mxu0 0.0
          %2149 = vmatpush1.msra.mxu0 0.0
          %2150 = vmatprep.subr.mxu0 0.0
          %2151 = vmatpush1.msra.mxu0 0.0
          %2152 = vmatprep.subr.mxu0 0.0
          %2153 = vmatpush1.msra.mxu0 0.0
          %2154 = vmatprep.subr.mxu0 0.0
          %2155 = vmatpush1.msra.mxu0 0.0
          %2156 = vmatprep.subr.mxu0 0.0
          %2157 = vmatpush1.msra.mxu0 0.0
          %2158 = vmatprep.subr.mxu0 0.0
          %2159 = vmatpush1.msra.mxu0 0.0
          %2160 = vmatprep.subr.mxu0 0.0
          %2161 = vmatpush1.msra.mxu0 0.0
          %2162 = vmatprep.subr.mxu0 0.0
          %2163 = vmatpush1.msra.mxu0 0.0
          %2164 = vmatprep.subr.mxu0 0.0
          %2165 = vmatpush1.msra.mxu0 0.0
          %2166 = vmatprep.subr.mxu0 0.0
          %2167 = vmatpush1.msra.mxu0 0.0
          %2168 = vmatprep.subr.mxu0 0.0
          %2169 = vmatpush1.msra.mxu0 0.0
          %2170 = vmatprep.subr.mxu0 0.0
          %v2171 = vand.u32 %v2135, 4294901760
          %2172 = vmatpush1.msra.mxu0 %v2171
          %2173 = vmatprep.subr.mxu0 0.0
          %v2174 = vand.u32 %v2134, 4294901760
          %2175 = vmatpush1.msra.mxu0 %v2174
          %2176 = vmatprep.subr.mxu0 0.0
          %v2177 = vand.u32 %v2133, 4294901760
          %2178 = vmatpush1.msra.mxu0 %v2177
          %2179 = vmatprep.subr.mxu0 0.0
          %v2180 = vand.u32 %v2132, 4294901760
          %2181 = vmatpush1.msra.mxu0 %v2180
          %2182 = vmatprep.subr.mxu0 0.0
          %2183 = vmatpush2.msra.mxu0 0.0
          %2184 = vmatprep.subr.mxu0 0.0
          %2185 = vmatpush2.msra.mxu0 0.0
          %2186 = vmatprep.subr.mxu0 0.0
          %2187 = vmatpush2.msra.mxu0 0.0
          %2188 = vmatprep.subr.mxu0 0.0
          %2189 = vmatpush2.msra.mxu0 0.0
          %2190 = vmatprep.subr.mxu0 0.0
          %2191 = vmatpush2.msra.mxu0 0.0
          %2192 = vmatprep.subr.mxu0 0.0
          %2193 = vmatpush2.msra.mxu0 0.0
          %2194 = vmatprep.subr.mxu0 0.0
          %2195 = vmatpush2.msra.mxu0 0.0
          %2196 = vmatprep.subr.mxu0 0.0
          %2197 = vmatpush2.msra.mxu0 0.0
          %2198 = vmatprep.subr.mxu0 0.0
          %2199 = vmatpush2.msra.mxu0 0.0
          %2200 = vmatprep.subr.mxu0 0.0
          %2201 = vmatpush2.msra.mxu0 0.0
          %2202 = vmatprep.subr.mxu0 0.0
          %2203 = vmatpush2.msra.mxu0 0.0
          %2204 = vmatprep.subr.mxu0 0.0
          %2205 = vmatpush2.msra.mxu0 0.0
          %2206 = vmatprep.subr.mxu0 0.0
          %2207 = vmatpush2.msra.mxu0 0.0
          %2208 = vmatprep.subr.mxu0 0.0
          %2209 = vmatpush2.msra.mxu0 0.0
          %2210 = vmatprep.subr.mxu0 0.0
          %2211 = vmatpush2.msra.mxu0 0.0
          %2212 = vmatprep.subr.mxu0 0.0
          %2213 = vmatpush2.msra.mxu0 0.0
          %2214 = vmatprep.mubr.f32.mxu0 0.0
          %v2215 = vand.u32 %v2144, 4294901760
          %v2216 = vsub.f32 %v2144, %v2215
          %v2217 = vand.u32 %v2216, 4294901760
          %v2218 = vsub.f32 %v2216, %v2217
          %v2219 = vand.u32 %v2218, 4294901760
          %2220 = vmatmul.mubr.f32.gmra.mxu0 %v2219
          %v2221 = vpop.f32.mrf.mxu0
          %v2222 = vadd.f32 %v2141, %v2221
          %v2223 = vpop.f32.mrf.mxu0
          %2224 = vdwg.mxu0
          %2225 = vmatprep.subr.mxu0 0.0
          %2226 = vmatpush1.msra.mxu0 0.0
          %2227 = vmatprep.subr.mxu0 0.0
          %2228 = vmatpush1.msra.mxu0 0.0
          %2229 = vmatprep.subr.mxu0 0.0
          %2230 = vmatpush1.msra.mxu0 0.0
          %2231 = vmatprep.subr.mxu0 0.0
          %2232 = vmatpush1.msra.mxu0 0.0
          %2233 = vmatprep.subr.mxu0 0.0
          %2234 = vmatpush1.msra.mxu0 0.0
          %2235 = vmatprep.subr.mxu0 0.0
          %2236 = vmatpush1.msra.mxu0 0.0
          %2237 = vmatprep.subr.mxu0 0.0
          %2238 = vmatpush1.msra.mxu0 0.0
          %2239 = vmatprep.subr.mxu0 0.0
          %2240 = vmatpush1.msra.mxu0 0.0
          %2241 = vmatprep.subr.mxu0 0.0
          %2242 = vmatpush1.msra.mxu0 0.0
          %2243 = vmatprep.subr.mxu0 0.0
          %2244 = vmatpush1.msra.mxu0 0.0
          %2245 = vmatprep.subr.mxu0 0.0
          %2246 = vmatpush1.msra.mxu0 0.0
          %2247 = vmatprep.subr.mxu0 0.0
          %2248 = vmatpush1.msra.mxu0 0.0
          %2249 = vmatprep.subr.mxu0 0.0
          %v2250 = vand.u32 %v2135, 4294901760
          %v2251 = vsub.f32 %v2135, %v2250
          %v2252 = vand.u32 %v2251, 4294901760
          %v2253 = vsub.f32 %v2251, %v2252
          %v2254 = vand.u32 %v2253, 4294901760
          %2255 = vmatpush1.msra.mxu0 %v2254
          %2256 = vmatprep.subr.mxu0 0.0
          %v2257 = vand.u32 %v2134, 4294901760
          %v2258 = vsub.f32 %v2134, %v2257
          %v2259 = vand.u32 %v2258, 4294901760
          %v2260 = vsub.f32 %v2258, %v2259
          %v2261 = vand.u32 %v2260, 4294901760
          %2262 = vmatpush1.msra.mxu0 %v2261
          %2263 = vmatprep.subr.mxu0 0.0
          %v2264 = vand.u32 %v2133, 4294901760
          %v2265 = vsub.f32 %v2133, %v2264
          %v2266 = vand.u32 %v2265, 4294901760
          %v2267 = vsub.f32 %v2265, %v2266
          %v2268 = vand.u32 %v2267, 4294901760
          %2269 = vmatpush1.msra.mxu0 %v2268
          %2270 = vmatprep.subr.mxu0 0.0
          %v2271 = vand.u32 %v2132, 4294901760
          %v2272 = vsub.f32 %v2132, %v2271
          %v2273 = vand.u32 %v2272, 4294901760
          %v2274 = vsub.f32 %v2272, %v2273
          %v2275 = vand.u32 %v2274, 4294901760
          %2276 = vmatpush1.msra.mxu0 %v2275
          %2277 = vmatprep.subr.mxu0 0.0
          %2278 = vmatpush2.msra.mxu0 0.0
          %2279 = vmatprep.subr.mxu0 0.0
          %2280 = vmatpush2.msra.mxu0 0.0
          %2281 = vmatprep.subr.mxu0 0.0
          %2282 = vmatpush2.msra.mxu0 0.0
          %2283 = vmatprep.subr.mxu0 0.0
          %2284 = vmatpush2.msra.mxu0 0.0
          %2285 = vmatprep.subr.mxu0 0.0
          %2286 = vmatpush2.msra.mxu0 0.0
          %2287 = vmatprep.subr.mxu0 0.0
          %2288 = vmatpush2.msra.mxu0 0.0
          %2289 = vmatprep.subr.mxu0 0.0
          %2290 = vmatpush2.msra.mxu0 0.0
          %2291 = vmatprep.subr.mxu0 0.0
          %2292 = vmatpush2.msra.mxu0 0.0
          %2293 = vmatprep.subr.mxu0 0.0
          %2294 = vmatpush2.msra.mxu0 0.0
          %2295 = vmatprep.subr.mxu0 0.0
          %2296 = vmatpush2.msra.mxu0 0.0
          %2297 = vmatprep.subr.mxu0 0.0
          %2298 = vmatpush2.msra.mxu0 0.0
          %2299 = vmatprep.subr.mxu0 0.0
          %2300 = vmatpush2.msra.mxu0 0.0
          %2301 = vmatprep.subr.mxu0 0.0
          %2302 = vmatpush2.msra.mxu0 0.0
          %2303 = vmatprep.subr.mxu0 0.0
          %2304 = vmatpush2.msra.mxu0 0.0
          %2305 = vmatprep.subr.mxu0 0.0
          %2306 = vmatpush2.msra.mxu0 0.0
          %2307 = vmatprep.subr.mxu0 0.0
          %2308 = vmatpush2.msra.mxu0 0.0
          %2309 = vmatprep.mubr.f32.mxu0 0.0
          %v2310 = vand.u32 %v2144, 4294901760
          %2311 = vmatmul.mubr.f32.gmra.mxu0 %v2310
          %v2312 = vpop.f32.mrf.mxu0
          %v2313 = vadd.f32 %v2222, %v2312
          %v2314 = vpop.f32.mrf.mxu0
          %2315 = vdwg.mxu0
          %2316 = vmatprep.subr.mxu0 0.0
          %2317 = vmatpush1.msra.mxu0 0.0
          %2318 = vmatprep.subr.mxu0 0.0
          %2319 = vmatpush1.msra.mxu0 0.0
          %2320 = vmatprep.subr.mxu0 0.0
          %2321 = vmatpush1.msra.mxu0 0.0
          %2322 = vmatprep.subr.mxu0 0.0
          %2323 = vmatpush1.msra.mxu0 0.0
          %2324 = vmatprep.subr.mxu0 0.0
          %2325 = vmatpush1.msra.mxu0 0.0
          %2326 = vmatprep.subr.mxu0 0.0
          %2327 = vmatpush1.msra.mxu0 0.0
          %2328 = vmatprep.subr.mxu0 0.0
          %2329 = vmatpush1.msra.mxu0 0.0
          %2330 = vmatprep.subr.mxu0 0.0
          %2331 = vmatpush1.msra.mxu0 0.0
          %2332 = vmatprep.subr.mxu0 0.0
          %2333 = vmatpush1.msra.mxu0 0.0
          %2334 = vmatprep.subr.mxu0 0.0
          %2335 = vmatpush1.msra.mxu0 0.0
          %2336 = vmatprep.subr.mxu0 0.0
          %2337 = vmatpush1.msra.mxu0 0.0
          %2338 = vmatprep.subr.mxu0 0.0
          %2339 = vmatpush1.msra.mxu0 0.0
          %2340 = vmatprep.subr.mxu0 0.0
          %v2341 = vand.u32 %v2135, 4294901760
          %v2342 = vsub.f32 %v2135, %v2341
          %2343 = vmatpush1.msra.mxu0 %v2342
          %2344 = vmatprep.subr.mxu0 0.0
          %v2345 = vand.u32 %v2134, 4294901760
          %v2346 = vsub.f32 %v2134, %v2345
          %2347 = vmatpush1.msra.mxu0 %v2346
          %2348 = vmatprep.subr.mxu0 0.0
          %v2349 = vand.u32 %v2133, 4294901760
          %v2350 = vsub.f32 %v2133, %v2349
          %2351 = vmatpush1.msra.mxu0 %v2350
          %2352 = vmatprep.subr.mxu0 0.0
          %v2353 = vand.u32 %v2132, 4294901760
          %v2354 = vsub.f32 %v2132, %v2353
          %2355 = vmatpush1.msra.mxu0 %v2354
          %2356 = vmatprep.subr.mxu0 0.0
          %2357 = vmatpush2.msra.mxu0 0.0
          %2358 = vmatprep.subr.mxu0 0.0
          %2359 = vmatpush2.msra.mxu0 0.0
          %2360 = vmatprep.subr.mxu0 0.0
          %2361 = vmatpush2.msra.mxu0 0.0
          %2362 = vmatprep.subr.mxu0 0.0
          %2363 = vmatpush2.msra.mxu0 0.0
          %2364 = vmatprep.subr.mxu0 0.0
          %2365 = vmatpush2.msra.mxu0 0.0
          %2366 = vmatprep.subr.mxu0 0.0
          %2367 = vmatpush2.msra.mxu0 0.0
          %2368 = vmatprep.subr.mxu0 0.0
          %2369 = vmatpush2.msra.mxu0 0.0
          %2370 = vmatprep.subr.mxu0 0.0
          %2371 = vmatpush2.msra.mxu0 0.0
          %2372 = vmatprep.subr.mxu0 0.0
          %2373 = vmatpush2.msra.mxu0 0.0
          %2374 = vmatprep.subr.mxu0 0.0
          %2375 = vmatpush2.msra.mxu0 0.0
          %2376 = vmatprep.subr.mxu0 0.0
          %2377 = vmatpush2.msra.mxu0 0.0
          %2378 = vmatprep.subr.mxu0 0.0
          %2379 = vmatpush2.msra.mxu0 0.0
          %2380 = vmatprep.subr.mxu0 0.0
          %2381 = vmatpush2.msra.mxu0 0.0
          %2382 = vmatprep.subr.mxu0 0.0
          %2383 = vmatpush2.msra.mxu0 0.0
          %2384 = vmatprep.subr.mxu0 0.0
          %2385 = vmatpush2.msra.mxu0 0.0
          %2386 = vmatprep.subr.mxu0 0.0
          %2387 = vmatpush2.msra.mxu0 0.0
          %2388 = vmatprep.mubr.f32.mxu0 0.0
          %v2389 = vand.u32 %v2144, 4294901760
          %v2390 = vsub.f32 %v2144, %v2389
          %2391 = vmatmul.mubr.f32.gmra.mxu0 %v2390
          %v2392 = vpop.f32.mrf.mxu0
          %v2393 = vadd.f32 %v2313, %v2392
          %v2394 = vpop.f32.mrf.mxu0
          %2395 = vdwg.mxu0
          %2396 = vmatprep.subr.mxu0 0.0
          %2397 = vmatpush1.msra.mxu0 0.0
          %2398 = vmatprep.subr.mxu0 0.0
          %2399 = vmatpush1.msra.mxu0 0.0
          %2400 = vmatprep.subr.mxu0 0.0
          %2401 = vmatpush1.msra.mxu0 0.0
          %2402 = vmatprep.subr.mxu0 0.0
          %2403 = vmatpush1.msra.mxu0 0.0
          %2404 = vmatprep.subr.mxu0 0.0
          %2405 = vmatpush1.msra.mxu0 0.0
          %2406 = vmatprep.subr.mxu0 0.0
          %2407 = vmatpush1.msra.mxu0 0.0
          %2408 = vmatprep.subr.mxu0 0.0
          %2409 = vmatpush1.msra.mxu0 0.0
          %2410 = vmatprep.subr.mxu0 0.0
          %2411 = vmatpush1.msra.mxu0 0.0
          %2412 = vmatprep.subr.mxu0 0.0
          %2413 = vmatpush1.msra.mxu0 0.0
          %2414 = vmatprep.subr.mxu0 0.0
          %2415 = vmatpush1.msra.mxu0 0.0
          %2416 = vmatprep.subr.mxu0 0.0
          %2417 = vmatpush1.msra.mxu0 0.0
          %2418 = vmatprep.subr.mxu0 0.0
          %2419 = vmatpush1.msra.mxu0 0.0
          %2420 = vmatprep.subr.mxu0 0.0
          %v2421 = vand.u32 %v2135, 4294901760
          %2422 = vmatpush1.msra.mxu0 %v2421
          %2423 = vmatprep.subr.mxu0 0.0
          %v2424 = vand.u32 %v2134, 4294901760
          %2425 = vmatpush1.msra.mxu0 %v2424
          %2426 = vmatprep.subr.mxu0 0.0
          %v2427 = vand.u32 %v2133, 4294901760
          %2428 = vmatpush1.msra.mxu0 %v2427
          %2429 = vmatprep.subr.mxu0 0.0
          %v2430 = vand.u32 %v2132, 4294901760
          %2431 = vmatpush1.msra.mxu0 %v2430
          %2432 = vmatprep.subr.mxu0 0.0
          %2433 = vmatpush2.msra.mxu0 0.0
          %2434 = vmatprep.subr.mxu0 0.0
          %2435 = vmatpush2.msra.mxu0 0.0
          %2436 = vmatprep.subr.mxu0 0.0
          %2437 = vmatpush2.msra.mxu0 0.0
          %2438 = vmatprep.subr.mxu0 0.0
          %2439 = vmatpush2.msra.mxu0 0.0
          %2440 = vmatprep.subr.mxu0 0.0
          %2441 = vmatpush2.msra.mxu0 0.0
          %2442 = vmatprep.subr.mxu0 0.0
          %2443 = vmatpush2.msra.mxu0 0.0
          %2444 = vmatprep.subr.mxu0 0.0
          %2445 = vmatpush2.msra.mxu0 0.0
          %2446 = vmatprep.subr.mxu0 0.0
          %2447 = vmatpush2.msra.mxu0 0.0
          %2448 = vmatprep.subr.mxu0 0.0
          %2449 = vmatpush2.msra.mxu0 0.0
          %2450 = vmatprep.subr.mxu0 0.0
          %2451 = vmatpush2.msra.mxu0 0.0
          %2452 = vmatprep.subr.mxu0 0.0
          %2453 = vmatpush2.msra.mxu0 0.0
          %2454 = vmatprep.subr.mxu0 0.0
          %2455 = vmatpush2.msra.mxu0 0.0
          %2456 = vmatprep.subr.mxu0 0.0
          %2457 = vmatpush2.msra.mxu0 0.0
          %2458 = vmatprep.subr.mxu0 0.0
          %2459 = vmatpush2.msra.mxu0 0.0
          %2460 = vmatprep.subr.mxu0 0.0
          %2461 = vmatpush2.msra.mxu0 0.0
          %2462 = vmatprep.subr.mxu0 0.0
          %2463 = vmatpush2.msra.mxu0 0.0
          %2464 = vmatprep.mubr.f32.mxu0 0.0
          %v2465 = vand.u32 %v2144, 4294901760
          %v2466 = vsub.f32 %v2144, %v2465
          %v2467 = vand.u32 %v2466, 4294901760
          %2468 = vmatmul.mubr.f32.gmra.mxu0 %v2467
          %v2469 = vpop.f32.mrf.mxu0
          %v2470 = vadd.f32 %v2393, %v2469
          %v2471 = vpop.f32.mrf.mxu0
          %2472 = vdwg.mxu0
          %2473 = vmatprep.subr.mxu0 0.0
          %2474 = vmatpush1.msra.mxu0 0.0
          %2475 = vmatprep.subr.mxu0 0.0
          %2476 = vmatpush1.msra.mxu0 0.0
          %2477 = vmatprep.subr.mxu0 0.0
          %2478 = vmatpush1.msra.mxu0 0.0
          %2479 = vmatprep.subr.mxu0 0.0
          %2480 = vmatpush1.msra.mxu0 0.0
          %2481 = vmatprep.subr.mxu0 0.0
          %2482 = vmatpush1.msra.mxu0 0.0
          %2483 = vmatprep.subr.mxu0 0.0
          %2484 = vmatpush1.msra.mxu0 0.0
          %2485 = vmatprep.subr.mxu0 0.0
          %2486 = vmatpush1.msra.mxu0 0.0
          %2487 = vmatprep.subr.mxu0 0.0
          %2488 = vmatpush1.msra.mxu0 0.0
          %2489 = vmatprep.subr.mxu0 0.0
          %2490 = vmatpush1.msra.mxu0 0.0
          %2491 = vmatprep.subr.mxu0 0.0
          %2492 = vmatpush1.msra.mxu0 0.0
          %2493 = vmatprep.subr.mxu0 0.0
          %2494 = vmatpush1.msra.mxu0 0.0
          %2495 = vmatprep.subr.mxu0 0.0
          %2496 = vmatpush1.msra.mxu0 0.0
          %2497 = vmatprep.subr.mxu0 0.0
          %v2498 = vand.u32 %v2135, 4294901760
          %v2499 = vsub.f32 %v2135, %v2498
          %v2500 = vand.u32 %v2499, 4294901760
          %2501 = vmatpush1.msra.mxu0 %v2500
          %2502 = vmatprep.subr.mxu0 0.0
          %v2503 = vand.u32 %v2134, 4294901760
          %v2504 = vsub.f32 %v2134, %v2503
          %v2505 = vand.u32 %v2504, 4294901760
          %2506 = vmatpush1.msra.mxu0 %v2505
          %2507 = vmatprep.subr.mxu0 0.0
          %v2508 = vand.u32 %v2133, 4294901760
          %v2509 = vsub.f32 %v2133, %v2508
          %v2510 = vand.u32 %v2509, 4294901760
          %2511 = vmatpush1.msra.mxu0 %v2510
          %2512 = vmatprep.subr.mxu0 0.0
          %v2513 = vand.u32 %v2132, 4294901760
          %v2514 = vsub.f32 %v2132, %v2513
          %v2515 = vand.u32 %v2514, 4294901760
          %2516 = vmatpush1.msra.mxu0 %v2515
          %2517 = vmatprep.subr.mxu0 0.0
          %2518 = vmatpush2.msra.mxu0 0.0
          %2519 = vmatprep.subr.mxu0 0.0
          %2520 = vmatpush2.msra.mxu0 0.0
          %2521 = vmatprep.subr.mxu0 0.0
          %2522 = vmatpush2.msra.mxu0 0.0
          %2523 = vmatprep.subr.mxu0 0.0
          %2524 = vmatpush2.msra.mxu0 0.0
          %2525 = vmatprep.subr.mxu0 0.0
          %2526 = vmatpush2.msra.mxu0 0.0
          %2527 = vmatprep.subr.mxu0 0.0
          %2528 = vmatpush2.msra.mxu0 0.0
          %2529 = vmatprep.subr.mxu0 0.0
          %2530 = vmatpush2.msra.mxu0 0.0
          %2531 = vmatprep.subr.mxu0 0.0
          %2532 = vmatpush2.msra.mxu0 0.0
          %2533 = vmatprep.subr.mxu0 0.0
          %2534 = vmatpush2.msra.mxu0 0.0
          %2535 = vmatprep.subr.mxu0 0.0
          %2536 = vmatpush2.msra.mxu0 0.0
          %2537 = vmatprep.subr.mxu0 0.0
          %2538 = vmatpush2.msra.mxu0 0.0
          %2539 = vmatprep.subr.mxu0 0.0
          %2540 = vmatpush2.msra.mxu0 0.0
          %2541 = vmatprep.subr.mxu0 0.0
          %2542 = vmatpush2.msra.mxu0 0.0
          %2543 = vmatprep.subr.mxu0 0.0
          %2544 = vmatpush2.msra.mxu0 0.0
          %2545 = vmatprep.subr.mxu0 0.0
          %2546 = vmatpush2.msra.mxu0 0.0
          %2547 = vmatprep.subr.mxu0 0.0
          %2548 = vmatpush2.msra.mxu0 0.0
          %2549 = vmatprep.mubr.f32.mxu0 0.0
          %v2550 = vand.u32 %v2144, 4294901760
          %2551 = vmatmul.mubr.f32.gmra.mxu0 %v2550
          %v2552 = vpop.f32.mrf.mxu0
          %v2553 = vadd.f32 %v2470, %v2552
          %v2554 = vpop.f32.mrf.mxu0
          %2555 = vdwg.mxu0
          %2556 = vmatprep.subr.mxu0 0.0
          %2557 = vmatpush1.msra.mxu0 0.0
          %2558 = vmatprep.subr.mxu0 0.0
          %2559 = vmatpush1.msra.mxu0 0.0
          %2560 = vmatprep.subr.mxu0 0.0
          %2561 = vmatpush1.msra.mxu0 0.0
          %2562 = vmatprep.subr.mxu0 0.0
          %2563 = vmatpush1.msra.mxu0 0.0
          %2564 = vmatprep.subr.mxu0 0.0
          %2565 = vmatpush1.msra.mxu0 0.0
          %2566 = vmatprep.subr.mxu0 0.0
          %2567 = vmatpush1.msra.mxu0 0.0
          %2568 = vmatprep.subr.mxu0 0.0
          %2569 = vmatpush1.msra.mxu0 0.0
          %2570 = vmatprep.subr.mxu0 0.0
          %2571 = vmatpush1.msra.mxu0 0.0
          %2572 = vmatprep.subr.mxu0 0.0
          %2573 = vmatpush1.msra.mxu0 0.0
          %2574 = vmatprep.subr.mxu0 0.0
          %2575 = vmatpush1.msra.mxu0 0.0
          %2576 = vmatprep.subr.mxu0 0.0
          %2577 = vmatpush1.msra.mxu0 0.0
          %2578 = vmatprep.subr.mxu0 0.0
          %2579 = vmatpush1.msra.mxu0 0.0
          %2580 = vmatprep.subr.mxu0 0.0
          %v2581 = vand.u32 %v2135, 4294901760
          %2582 = vmatpush1.msra.mxu0 %v2581
          %2583 = vmatprep.subr.mxu0 0.0
          %v2584 = vand.u32 %v2134, 4294901760
          %2585 = vmatpush1.msra.mxu0 %v2584
          %2586 = vmatprep.subr.mxu0 0.0
          %v2587 = vand.u32 %v2133, 4294901760
          %2588 = vmatpush1.msra.mxu0 %v2587
          %2589 = vmatprep.subr.mxu0 0.0
          %v2590 = vand.u32 %v2132, 4294901760
          %2591 = vmatpush1.msra.mxu0 %v2590
          %2592 = vmatprep.subr.mxu0 0.0
          %2593 = vmatpush2.msra.mxu0 0.0
          %2594 = vmatprep.subr.mxu0 0.0
          %2595 = vmatpush2.msra.mxu0 0.0
          %2596 = vmatprep.subr.mxu0 0.0
          %2597 = vmatpush2.msra.mxu0 0.0
          %2598 = vmatprep.subr.mxu0 0.0
          %2599 = vmatpush2.msra.mxu0 0.0
          %2600 = vmatprep.subr.mxu0 0.0
          %2601 = vmatpush2.msra.mxu0 0.0
          %2602 = vmatprep.subr.mxu0 0.0
          %2603 = vmatpush2.msra.mxu0 0.0
          %2604 = vmatprep.subr.mxu0 0.0
          %2605 = vmatpush2.msra.mxu0 0.0
          %2606 = vmatprep.subr.mxu0 0.0
          %2607 = vmatpush2.msra.mxu0 0.0
          %2608 = vmatprep.subr.mxu0 0.0
          %2609 = vmatpush2.msra.mxu0 0.0
          %2610 = vmatprep.subr.mxu0 0.0
          %2611 = vmatpush2.msra.mxu0 0.0
          %2612 = vmatprep.subr.mxu0 0.0
          %2613 = vmatpush2.msra.mxu0 0.0
          %2614 = vmatprep.subr.mxu0 0.0
          %2615 = vmatpush2.msra.mxu0 0.0
          %2616 = vmatprep.subr.mxu0 0.0
          %2617 = vmatpush2.msra.mxu0 0.0
          %2618 = vmatprep.subr.mxu0 0.0
          %2619 = vmatpush2.msra.mxu0 0.0
          %2620 = vmatprep.subr.mxu0 0.0
          %2621 = vmatpush2.msra.mxu0 0.0
          %2622 = vmatprep.subr.mxu0 0.0
          %2623 = vmatpush2.msra.mxu0 0.0
          %2624 = vmatprep.mubr.f32.mxu0 0.0
          %v2625 = vand.u32 %v2144, 4294901760
          %2626 = vmatmul.mubr.f32.gmra.mxu0 %v2625
          %v2627 = vpop.f32.mrf.mxu0
          %v2628 = vadd.f32 %v2553, %v2627
          %v2629 = vpop.f32.mrf.mxu0
          %2630 = vdwg.mxu0
          %v2631 = vxor.u32 %v2628, 2147483648
          %v2632 = vmul.f32 %v2631, 1.442695
          %v2633 = vpow.pop %v2632
          %v2634 = vadd.f32 %v2633, 1.0
          %v2635 = vrcp.pop %v2634
          %v2636 = vmul.f32 1.0, %v2635
          %2637 = vst.msk [vmem:[#allocation4] sm:$0x7] %vm1107, %v2636
        $region60: #{tpu_custom_call.1} parent=51 // pred_fallthru
          _
        // Predicated region
        $region61: #{tpu_custom_call.1} parent=51 // pred_check
          %p2638 = pneg %p211
        $region62: #{tpu_custom_call.1} parent=51 // pred_check_branch
          %2640 = sbr.rel (%p2638) target = $region64
        $region63: #{tpu_custom_call.1} parent=51 // pred_region
          %s2642 = ssub.s32 64, 64
          %2643 = vsyncadd [#allocation5], %s2642
          %s2645 = sshll.u32 [#allocation4], 4
          %s2646 = int_to_ptr.vmem [resolvable:$true] %s2645
          %2648 = dma.vmem_to_hbm [thread:$0]  %s2646, 64, %s8, [#allocation5]
        $region64: #{tpu_custom_call.1} parent=51 // pred_fallthru
          _
        // Predicated region
        $region65: #{tpu_custom_call.1} parent=51 // pred_check
          %p2649 = pneg %p211
        $region66: #{tpu_custom_call.1} parent=51 // pred_check_branch
          %2651 = sbr.rel (%p2649) target = $region68
        $region67: #{tpu_custom_call.1} parent=51 // pred_region
          %2652 = dma.done [#allocation5], 64
        $region68: #{tpu_custom_call.1} parent=51 // pred_fallthru
          _
      $region52: #{tpu_custom_call.1} parent=5 // pred_fallthru
        _
      %p2653 = scmp.le.s32.totalorder 2, %s15
      // Predicated region
      $region69: #{tpu_custom_call.1} parent=5 // pred_check
        %p2654 = pneg %p2653
      $region70: #{tpu_custom_call.1} parent=5 // pred_check_branch
        %2656 = sbr.rel (%p2654) target = $region72
      $region71: #{tpu_custom_call.1} parent=5 // pred_region
        %s2657 = ssub.s32 %s15, 2
      $region72: #{tpu_custom_call.1} parent=5 // pred_fallthru
        _
    $region6: #{tpu_custom_call.1} parent=1 // loop_footer
      %s19 = sadd.s32 1, %s15
    $region7: #{tpu_custom_call.1} parent=1 // loop_footer_branch
      %14 = sbr.rel target = $region3
    $region8: #{tpu_custom_call.1} parent=1 // loop_exit
      _
    %2658 = vsyncpa [#allocation5], 1
    %s2659 = scalar_lea.sflag [#allocation5], 1
    %2660 = vsyncpa %s2659, 1

</llo_original>
